<compile_context>
chip_gen: v5e
topology: v5e:2x2
jax: 0.10.0
libtpu: 0.0.40
codegen_flags: <defaults>
</compile_context>

<pallas_src>
import jax
import jax.numpy as jnp
from jax.experimental import pallas as pl
from jax.experimental.pallas import tpu as pltpu

_MiB = 1024 * 1024
_SMALL_INPUT_BYTES = 256 * 1024                  # below this, pallas_call overhead dominates
_LANE_CANDIDATES = (2048, 1024, 512, 256, 128)   # widest lane-dense slab that divides n_main


def _tanh_kernel(x_ref, o_ref):
    # Elementwise tanh on the EUP/VPU, whole tile at once.
    o_ref[...] = jnp.tanh(x_ref[...]).astype(o_ref.dtype)


def _vmem_capacity_bytes() -> int:
    """Best-effort per-core VMEM capacity; conservative (v7x) fallback."""
    try:
        cap = getattr(pltpu.get_tpu_info(), "vmem_capacity_bytes", None)
        if cap:
            return int(cap)
    except Exception:
        pass
    return 64 * _MiB


def _tanh_2d(x2d: jax.Array, rows: int, lanes: int, dtype, itemsize: int) -> jax.Array:
    """Run the tiled Pallas tanh over a (rows, lanes) lane-dense 2-D view."""
    vmem_cap = _vmem_capacity_bytes()
    # ~8 MiB blocks on v7x (64 MiB VMEM), ~12 MiB on v5e/v6e (128 MiB VMEM).
    block_bytes = min(12 * _MiB, max(4 * _MiB, vmem_cap // 8))
    # in + out, each double-buffered = 4 buffers, plus headroom for internal scratch.
    vmem_limit = int(min(vmem_cap - 4 * _MiB, 4 * block_bytes + 8 * _MiB))

    # Sublane packing multiple: f32 -> 8, bf16 -> 16, int8/fp8 -> 32.
    sub = max(8, 32 // itemsize)

    tile_rows = max(sub, (block_bytes // (lanes * itemsize)) // sub * sub)
    if tile_rows >= rows:
        # Mid-size input: don't collapse to a single block — keep >= ~4 grid steps
        # so the software pipeline (prefetch / compute / writeback) overlaps.
        tile_rows = max(sub, ((rows + 3) // 4 + sub - 1) // sub * sub)
        if tile_rows >= rows:
            tile_rows = rows  # tiny: single full-extent block (always layout-legal)

    grid = (pl.cdiv(rows, tile_rows),)  # Pallas masks the partial last block

    return pl.pallas_call(
        _tanh_kernel,
        out_shape=jax.ShapeDtypeStruct((rows, lanes), dtype),
        grid=grid,
        in_specs=[pl.BlockSpec((tile_rows, lanes), lambda i: (i, 0))],
        out_specs=pl.BlockSpec((tile_rows, lanes), lambda i: (i, 0)),
        compiler_params=pltpu.CompilerParams(
            dimension_semantics=("parallel",),
            vmem_limit_bytes=vmem_limit,
        ),
    )(x2d)


def pallas_tanh(x: jax.Array) -> jax.Array:
    """Apply tanh elementwise via a Pallas TPU kernel (any shape, float dtypes)."""
    orig_shape = x.shape
    dtype = x.dtype
    n = x.size

    if n == 0:
        return x

    # Non-float dtypes: match torch type promotion (tanh of int tensor -> float);
    # not worth a kernel (rare path).
    if not jnp.issubdtype(dtype, jnp.floating):
        return jnp.tanh(x)

    itemsize = jnp.dtype(dtype).itemsize

    # Small-input fast path: strictly faster than launching a kernel.
    if n * itemsize <= _SMALL_INPUT_BYTES:
        return jnp.tanh(x)

    flat = x.reshape(-1)

    # Ragged sizes: run the kernel on the 128-aligned prefix only; the <=127-element
    # tail goes through plain jnp.tanh. No full-array pad copy, no full-array slice.
    tail_len = n % 128
    n_main = n - tail_len
    main = flat if tail_len == 0 else flat[:n_main]

    # Widest lane dimension that divides n_main exactly -> reshape is a free bitcast.
    lanes = 128
    for cand in _LANE_CANDIDATES:
        if n_main % cand == 0:
            lanes = cand
            break
    rows = n_main // lanes

    out_main = _tanh_2d(main.reshape(rows, lanes), rows, lanes, dtype, itemsize)

    if tail_len:
        tail_out = jnp.tanh(flat[n_main:])
        return jnp.concatenate([out_main.reshape(-1), tail_out]).reshape(orig_shape)
    return out_main.reshape(orig_shape)


class Tanh:
    """Tanh activation layer (mirrors the PyTorch module)."""

    def __init__(self):
        self.requires_grad = False
        self.cache = None

    def forward(self, inputs: jax.Array) -> jax.Array:
        if self.requires_grad:
            self.cache = inputs
        return pallas_tanh(inputs)

    def backward(self, inputs: jax.Array) -> jax.Array:
        # dtanh = 1 - tanh(cache)^2, then chain with incoming grad — faithful to the
        # PyTorch module's manual backward (not wired into JAX autodiff).
        t = pallas_tanh(self.cache)
        return (1.0 - t * t) * inputs

    def __call__(self, inputs: jax.Array) -> jax.Array:
        return self.forward(inputs)


if __name__ == "__main__":
    key = jax.random.PRNGKey(0)
    layer = Tanh()

    # Small NCHW input matching the module's typical use (hits the fast path).
    x_small = jax.random.normal(key, (2, 4, 16, 16), dtype=jnp.float32)
    y_small = jax.block_until_ready(layer(x_small))
    assert y_small.shape == x_small.shape and y_small.dtype == x_small.dtype
    assert jnp.allclose(y_small, jnp.tanh(x_small), atol=1e-6, rtol=1e-6)

    # Larger input exercising the tiled Pallas path (>= 4-step pipelined grid).
    k1, k2, k3 = jax.random.split(key, 3)
    x_big = jax.random.normal(k1, (1024, 1536), dtype=jnp.float32)
    y_big = jax.block_until_ready(layer(x_big))
    assert y_big.shape == x_big.shape and y_big.dtype == x_big.dtype
    assert jnp.allclose(y_big, jnp.tanh(x_big), atol=1e-6, rtol=1e-6)

    # bf16 end-to-end through the kernel (halved HBM traffic path).
    x_bf16 = jax.random.normal(k3, (1024, 2048), dtype=jnp.bfloat16)
    y_bf16 = jax.block_until_ready(layer(x_bf16))
    assert y_bf16.shape == x_bf16.shape and y_bf16.dtype == jnp.bfloat16
    assert jnp.allclose(y_bf16.astype(jnp.float32),
                        jnp.tanh(x_bf16).astype(jnp.float32), atol=1e-2, rtol=1e-2)

    # Ragged size exercising the prefix-kernel + tiny-tail path (no pad/slice copies).
    x_rag = jax.random.normal(k2, (1000, 333), dtype=jnp.float32)
    y_rag = jax.block_until_ready(layer(x_rag))
    assert y_rag.shape == x_rag.shape and y_rag.dtype == x_rag.dtype
    assert jnp.allclose(y_rag, jnp.tanh(x_rag), atol=1e-6, rtol=1e-6)

    # Backward semantics check against the analytic derivative.
    layer.requires_grad = True
    _ = layer(x_small)
    g = jnp.ones_like(x_small)
    dx = jax.block_until_ready(layer.backward(g))
    assert jnp.allclose(dx, (1.0 - jnp.tanh(x_small) ** 2) * g, atol=1e-6, rtol=1e-6)

    print("KERNEL_OK")
</pallas_src>

<mosaic_0001>
module attributes {stable_mosaic.version = 11 : i64} {
  func.func @_tanh_kernel(%arg0: i32, %arg1: memref<192x2048xf32, #tpu.memory_space<vmem>>, %arg2: memref<192x2048xf32, #tpu.memory_space<vmem>>) attributes {dimension_semantics = [#tpu.dimension_semantics<parallel>], iteration_bounds = array<i64: 4>, scalar_prefetch = 0 : i64, scratch_operands = 0 : i64, tpu.core_type = #tpu.core_type<tc>, window_params = [{transform_indices = @transform_0, window_bounds = array<i64: 192, 2048>}, {transform_indices = @transform_1, window_bounds = array<i64: 192, 2048>}]} {
    %c0 = arith.constant 0 : index
    %c0_0 = arith.constant 0 : index
    %0 = vector.load %arg1[%c0, %c0_0] : memref<192x2048xf32, #tpu.memory_space<vmem>>, vector<192x2048xf32>
    %1 = math.tanh %0 : vector<192x2048xf32>
    %c0_1 = arith.constant 0 : index
    %c0_2 = arith.constant 0 : index
    %2 = vector.load %arg2[%c0_1, %c0_2] : memref<192x2048xf32, #tpu.memory_space<vmem>>, vector<192x2048xf32>
    tpu.vector_store %arg2[%c0_1, %c0_2], %1 {strides = array<i32>} : memref<192x2048xf32, #tpu.memory_space<vmem>>, vector<192x2048xf32>,
    return
  }
  func.func @transform_0(%arg0: i32) -> (i32, i32) {
    %c0_i32 = arith.constant 0 : i32
    %c0_i32_0 = arith.constant 0 : i32
    return %arg0, %c0_i32 : i32, i32
  }
  func.func @transform_1(%arg0: i32) -> (i32, i32) {
    %c0_i32 = arith.constant 0 : i32
    %c0_i32_0 = arith.constant 0 : i32
    return %arg0, %c0_i32 : i32, i32
  }
}

</mosaic_0001>

<llo_original>
// kernel: tpu_custom_call.1
$region0: #{tpu_custom_call.1}
  #allocation0 [shape = 'u32[]', space=smem, size = 0x4, offset = 0x4, fixed_abs, tag = 'smem constant byte address 0x4 - core index']
  #allocation1 [shape = 'u32[72,128]{1,0:T(1,128)}', space=vmem, size = 0x9000, scoped, tag = 'internal scratch']
  %s0 = inlined_call_operand.hbm [shape: f32[768,2048], index: 0, kind: input, shape index: {}]
  %s1 = inlined_call_operand.hbm [shape: f32[768,2048], index: 1, kind: output, shape index: {}]
  %s2 = sld [smem:[#allocation0]]
  $region41: #{tpu_custom_call.1} parent=0
    _
  %s4 = ssub.s32 1, %s2
  %s5 = scalar_select 0, %s4, %s2
  $region1: #{tpu_custom_call.1} parent=0
    #allocation2 [shape = 'u8[3145728]{0}', space=vmem, size = 0x300000, scoped, tag = 'input window, operand 0']
    #allocation3 [shape = 's32[2]{0}', space=sflag, size = 0x8, scoped, tag = 'scoped memory for tpu_custom_call.1']
    #allocation4 [shape = 's32[2]{0}', space=sflag, size = 0x8, scoped, tag = 'scoped memory for tpu_custom_call.1']
    #allocation5 [shape = 'u8[3145728]{0}', space=vmem, size = 0x300000, scoped, tag = 'output window, operand 0']
    %6 = vsyncpa [#allocation3], 0
    %s7 = scalar_lea.sflag [#allocation3], 1
    %8 = vsyncpa %s7, 0
    %9 = vsyncpa [#allocation4], 0
    %s10 = scalar_lea.sflag [#allocation4], 1
    %11 = vsyncpa %s10, 0
    loop: start=0, step=1, limit=6
    $region2: #{tpu_custom_call.1} parent=1 // loop_pre_header
      _
    $region3: #{tpu_custom_call.1} parent=1 // loop_header
      %s13 = sphi 0, %s17
      %p14 = scmp.ge.s32.totalorder %s13, 6
      %s23 = sphi 0, %s25
      %s26 = sphi 0, %s23
      %s27 = sphi 0, %s26
      %s43 = sphi 0, %s27
      %s49 = sphi 0, %s51
      %s52 = sphi 0, %s49
      %s53 = sphi 0, %s52
      %s69 = sphi 0, %s53
    $region4: #{tpu_custom_call.1} parent=1 // loop_header_branch
      %16 = sbr.rel (%p14) target = $region8
    $region5: #{tpu_custom_call.1} parent=1 // loop_body
      %s18 = ssub.s32 %s13, 1
      %s19 = ssub.s32 %s13, 2
      %s20 = sadd.s32 %s13, 1
      %s21 = ssub.s32 %s13, %s20
      %p22 = scmp.eq.s32.totalorder %s21, 0
      %s24 = sadd.s32 %s23, 1
      %s25 = scalar_select %p22, %s23, %s24
      %p28 = pneg %p22
      %p29 = scmp.eq.s32.totalorder %s13, 3
      %p30 = por %p28, %p29
      %p31 = scmp.ne.s32.totalorder %s23, %s26
      %p32 = scmp.eq.s32.totalorder %s13, 0
      %p33 = por %p31, %p32
      %p34 = scmp.ne.s32.totalorder %s23, %s26
      %p35 = scmp.eq.s32.totalorder %s18, 3
      %p36 = por %p34, %p35
      %p37 = scmp.ne.s32.totalorder %s26, %s27
      %p38 = scmp.eq.s32.totalorder %s18, 0
      %p39 = por %p37, %p38
      %p40 = scmp.ne.s32.totalorder %s26, %s27
      %p41 = scmp.eq.s32.totalorder %s19, 3
      %p42 = por %p40, %p41
      %p44 = scmp.ne.s32.totalorder %s27, %s43
      %p45 = scmp.eq.s32.totalorder %s19, 0
      %p46 = por %p44, %p45
      %s47 = ssub.s32 %s13, %s20
      %p48 = scmp.eq.s32.totalorder %s47, 0
      %s50 = sadd.s32 %s49, 1
      %s51 = scalar_select %p48, %s49, %s50
      %p54 = pneg %p48
      %p55 = scmp.eq.s32.totalorder %s13, 3
      %p56 = por %p54, %p55
      %p57 = scmp.ne.s32.totalorder %s49, %s52
      %p58 = scmp.eq.s32.totalorder %s13, 0
      %p59 = por %p57, %p58
      %p60 = scmp.ne.s32.totalorder %s49, %s52
      %p61 = scmp.eq.s32.totalorder %s18, 3
      %p62 = por %p60, %p61
      %p63 = scmp.ne.s32.totalorder %s52, %s53
      %p64 = scmp.eq.s32.totalorder %s18, 0
      %p65 = por %p63, %p64
      %p66 = scmp.ne.s32.totalorder %s52, %s53
      %p67 = scmp.eq.s32.totalorder %s19, 3
      %p68 = por %p66, %p67
      %p70 = scmp.ne.s32.totalorder %s53, %s69
      %p71 = scmp.eq.s32.totalorder %s19, 0
      %p72 = por %p70, %p71
      %p73 = scmp.le.s32.totalorder 1, %s13
      %p74 = scmp.lt.s32.totalorder %s13, 5
      %p75 = pnand %p73, %p74
      %p76 = pneg %p75
      // Predicated region
      $region9: #{tpu_custom_call.1} parent=5 // pred_check
        _
      $region10: #{tpu_custom_call.1} parent=5 // pred_check_branch
        %78 = sbr.rel (%p75) target = $region12
      $region11: #{tpu_custom_call.1} parent=5 // pred_region
        %s79 = ssub.s32 %s13, 1
      $region12: #{tpu_custom_call.1} parent=5 // pred_fallthru
        _
      %p80 = scmp.lt.s32.totalorder %s13, 4
      // Predicated region
      $region13: #{tpu_custom_call.1} parent=5 // pred_check
        %p81 = pneg %p80
      $region14: #{tpu_custom_call.1} parent=5 // pred_check_branch
        %83 = sbr.rel (%p81) target = $region16
      $region15: #{tpu_custom_call.1} parent=5 // pred_region
        // Predicated region
        $region17: #{tpu_custom_call.1} parent=15 // pred_check
          %p84 = pneg %p33
        $region18: #{tpu_custom_call.1} parent=15 // pred_check_branch
          %86 = sbr.rel (%p84) target = $region20
        $region19: #{tpu_custom_call.1} parent=15 // pred_region
          %s87 = sand.u32 %s23, 1
          %s88 = scalar_lea.sflag [#allocation3], %s87
          %s89 = sand.u32 %s23, 1
          %s90 = smul.addr %s89, 3072
          %s91 = scalar_lea.vmem [#allocation2], %s90
          %s92 = smul.u32 24, %s13
          %94 = vsyncadd %s88, 0
          %s95 = smul.addr %s92, 16
          %s96 = smul.addr %s95, 8
          %s97 = scalar_lea.hbm %s0, %s96
          %s98 = sshll.u32 %s97, 4
          %s99 = int_to_ptr.hbm [resolvable:$true] %s98
          %s100 = sshll.u32 %s91, 4
          %s101 = int_to_ptr.vmem [resolvable:$true] %s100
          %106 = dma.hbm_to_vmem [thread:$0]  %s99, 49152, %s101, %s88, 2048, 2048, 128
        $region20: #{tpu_custom_call.1} parent=15 // pred_fallthru
          _
      $region16: #{tpu_custom_call.1} parent=5 // pred_fallthru
        _
      %p107 = scmp.le.s32.totalorder 1, %s13
      %p108 = scmp.lt.s32.totalorder %s13, 5
      %p109 = pnand %p107, %p108
      %p110 = pneg %p109
      // Predicated region
      $region21: #{tpu_custom_call.1} parent=5 // pred_check
        _
      $region22: #{tpu_custom_call.1} parent=5 // pred_check_branch
        %112 = sbr.rel (%p109) target = $region24
      $region23: #{tpu_custom_call.1} parent=5 // pred_region
        %s113 = ssub.s32 %s13, 1
        %s114 = sand.u32 %s26, 1
        %s115 = scalar_lea.sflag [#allocation3], %s114
        %s116 = sand.u32 %s26, 1
        %s117 = smul.addr %s116, 3072
        %s118 = scalar_lea.vmem [#allocation2], %s117
        // Predicated region
        $region25: #{tpu_custom_call.1} parent=23 // pred_check
          %p119 = pneg %p39
        $region26: #{tpu_custom_call.1} parent=23 // pred_check_branch
          %121 = sbr.rel (%p119) target = $region28
        $region27: #{tpu_custom_call.1} parent=23 // pred_region
          %123 = dma.done %s115, 49152
        $region28: #{tpu_custom_call.1} parent=23 // pred_fallthru
          _
        %s124 = sand.u32 %s26, 1
        %s125 = scalar_lea.sflag [#allocation3], %s124
        %s126 = sand.u32 %s26, 1
        %s127 = smul.addr %s126, 3072
        %s128 = scalar_lea.vmem [#allocation2], %s127
        %p129 = pneg %p39
        %p130 = pneg %p36
        %p131 = pneg %p65
        %p132 = pneg %p62
        %s133 = sand.u32 %s52, 1
        %s134 = scalar_lea.sflag [#allocation4], %s133
        %s135 = sand.u32 %s52, 1
        %s136 = smul.addr %s135, 3072
        %s137 = scalar_lea.vmem [#allocation5], %s136
        %s138 = smul.u32 24, %s18
        %s139 = smul.u32 24, %s18
        %v140 = vld [vmem:[%s118] sm:$0xff]
        %v141 = vld [vmem:[%s118 + $0x8] sm:$0xff]
        %v142 = vld [vmem:[%s118 + $0x10] sm:$0xff]
        %v143 = vld [vmem:[%s118 + $0x18] sm:$0xff]
        %v144 = vld [vmem:[%s118 + $0x20] sm:$0xff]
        %v145 = vld [vmem:[%s118 + $0x28] sm:$0xff]
        %v146 = vld [vmem:[%s118 + $0x30] sm:$0xff]
        %v147 = vld [vmem:[%s118 + $0x38] sm:$0xff]
        %v148 = vld [vmem:[%s118 + $0x40] sm:$0xff]
        %v149 = vld [vmem:[%s118 + $0x48] sm:$0xff]
        %v150 = vld [vmem:[%s118 + $0x50] sm:$0xff]
        %v151 = vld [vmem:[%s118 + $0x58] sm:$0xff]
        %v152 = vld [vmem:[%s118 + $0x60] sm:$0xff]
        %v153 = vld [vmem:[%s118 + $0x68] sm:$0xff]
        %v154 = vld [vmem:[%s118 + $0x70] sm:$0xff]
        %v155 = vld [vmem:[%s118 + $0x78] sm:$0xff]
        %v156 = vld [vmem:[%s118 + $0x80] sm:$0xff]
        %v157 = vld [vmem:[%s118 + $0x88] sm:$0xff]
        %v158 = vld [vmem:[%s118 + $0x90] sm:$0xff]
        %v159 = vld [vmem:[%s118 + $0x98] sm:$0xff]
        %v160 = vld [vmem:[%s118 + $0xa0] sm:$0xff]
        %v161 = vld [vmem:[%s118 + $0xa8] sm:$0xff]
        %v162 = vld [vmem:[%s118 + $0xb0] sm:$0xff]
        %v163 = vld [vmem:[%s118 + $0xb8] sm:$0xff]
        %v164 = vld [vmem:[%s118 + $0xc0] sm:$0xff]
        %v165 = vld [vmem:[%s118 + $0xc8] sm:$0xff]
        %v166 = vld [vmem:[%s118 + $0xd0] sm:$0xff]
        %v167 = vld [vmem:[%s118 + $0xd8] sm:$0xff]
        %v168 = vld [vmem:[%s118 + $0xe0] sm:$0xff]
        %v169 = vld [vmem:[%s118 + $0xe8] sm:$0xff]
        %v170 = vld [vmem:[%s118 + $0xf0] sm:$0xff]
        %v171 = vld [vmem:[%s118 + $0xf8] sm:$0xff]
        %v172 = vld [vmem:[%s118 + $0x100] sm:$0xff]
        %v173 = vld [vmem:[%s118 + $0x108] sm:$0xff]
        %v174 = vld [vmem:[%s118 + $0x110] sm:$0xff]
        %v175 = vld [vmem:[%s118 + $0x118] sm:$0xff]
        %v176 = vld [vmem:[%s118 + $0x120] sm:$0xff]
        %v177 = vld [vmem:[%s118 + $0x128] sm:$0xff]
        %v178 = vld [vmem:[%s118 + $0x130] sm:$0xff]
        %v179 = vld [vmem:[%s118 + $0x138] sm:$0xff]
        %v180 = vld [vmem:[%s118 + $0x140] sm:$0xff]
        %v181 = vld [vmem:[%s118 + $0x148] sm:$0xff]
        %v182 = vld [vmem:[%s118 + $0x150] sm:$0xff]
        %v183 = vld [vmem:[%s118 + $0x158] sm:$0xff]
        %v184 = vld [vmem:[%s118 + $0x160] sm:$0xff]
        %v185 = vld [vmem:[%s118 + $0x168] sm:$0xff]
        %v186 = vld [vmem:[%s118 + $0x170] sm:$0xff]
        %v187 = vld [vmem:[%s118 + $0x178] sm:$0xff]
        %v188 = vld [vmem:[%s118 + $0x180] sm:$0xff]
        %v189 = vld [vmem:[%s118 + $0x188] sm:$0xff]
        %v190 = vld [vmem:[%s118 + $0x190] sm:$0xff]
        %v191 = vld [vmem:[%s118 + $0x198] sm:$0xff]
        %v192 = vld [vmem:[%s118 + $0x1a0] sm:$0xff]
        %v193 = vld [vmem:[%s118 + $0x1a8] sm:$0xff]
        %v194 = vld [vmem:[%s118 + $0x1b0] sm:$0xff]
        %v195 = vld [vmem:[%s118 + $0x1b8] sm:$0xff]
        %v196 = vld [vmem:[%s118 + $0x1c0] sm:$0xff]
        %v197 = vld [vmem:[%s118 + $0x1c8] sm:$0xff]
        %v198 = vld [vmem:[%s118 + $0x1d0] sm:$0xff]
        %v199 = vld [vmem:[%s118 + $0x1d8] sm:$0xff]
        %v200 = vld [vmem:[%s118 + $0x1e0] sm:$0xff]
        %v201 = vld [vmem:[%s118 + $0x1e8] sm:$0xff]
        %v202 = vld [vmem:[%s118 + $0x1f0] sm:$0xff]
        %v203 = vld [vmem:[%s118 + $0x1f8] sm:$0xff]
        %v204 = vld [vmem:[%s118 + $0x200] sm:$0xff]
        %v205 = vld [vmem:[%s118 + $0x208] sm:$0xff]
        %v206 = vld [vmem:[%s118 + $0x210] sm:$0xff]
        %v207 = vld [vmem:[%s118 + $0x218] sm:$0xff]
        %v208 = vld [vmem:[%s118 + $0x220] sm:$0xff]
        %v209 = vld [vmem:[%s118 + $0x228] sm:$0xff]
        %v210 = vld [vmem:[%s118 + $0x230] sm:$0xff]
        %v211 = vld [vmem:[%s118 + $0x238] sm:$0xff]
        %v212 = vld [vmem:[%s118 + $0x240] sm:$0xff]
        %v213 = vld [vmem:[%s118 + $0x248] sm:$0xff]
        %v214 = vld [vmem:[%s118 + $0x250] sm:$0xff]
        %v215 = vld [vmem:[%s118 + $0x258] sm:$0xff]
        %v216 = vld [vmem:[%s118 + $0x260] sm:$0xff]
        %v217 = vld [vmem:[%s118 + $0x268] sm:$0xff]
        %v218 = vld [vmem:[%s118 + $0x270] sm:$0xff]
        %v219 = vld [vmem:[%s118 + $0x278] sm:$0xff]
        %v220 = vld [vmem:[%s118 + $0x280] sm:$0xff]
        %v221 = vld [vmem:[%s118 + $0x288] sm:$0xff]
        %v222 = vld [vmem:[%s118 + $0x290] sm:$0xff]
        %v223 = vld [vmem:[%s118 + $0x298] sm:$0xff]
        %v224 = vld [vmem:[%s118 + $0x2a0] sm:$0xff]
        %v225 = vld [vmem:[%s118 + $0x2a8] sm:$0xff]
        %v226 = vld [vmem:[%s118 + $0x2b0] sm:$0xff]
        %v227 = vld [vmem:[%s118 + $0x2b8] sm:$0xff]
        %v228 = vld [vmem:[%s118 + $0x2c0] sm:$0xff]
        %v229 = vld [vmem:[%s118 + $0x2c8] sm:$0xff]
        %v230 = vld [vmem:[%s118 + $0x2d0] sm:$0xff]
        %v231 = vld [vmem:[%s118 + $0x2d8] sm:$0xff]
        %v232 = vld [vmem:[%s118 + $0x2e0] sm:$0xff]
        %v233 = vld [vmem:[%s118 + $0x2e8] sm:$0xff]
        %v234 = vld [vmem:[%s118 + $0x2f0] sm:$0xff]
        %v235 = vld [vmem:[%s118 + $0x2f8] sm:$0xff]
        %v236 = vld [vmem:[%s118 + $0x300] sm:$0xff]
        %v237 = vld [vmem:[%s118 + $0x308] sm:$0xff]
        %v238 = vld [vmem:[%s118 + $0x310] sm:$0xff]
        %v239 = vld [vmem:[%s118 + $0x318] sm:$0xff]
        %v240 = vld [vmem:[%s118 + $0x320] sm:$0xff]
        %v241 = vld [vmem:[%s118 + $0x328] sm:$0xff]
        %v242 = vld [vmem:[%s118 + $0x330] sm:$0xff]
        %v243 = vld [vmem:[%s118 + $0x338] sm:$0xff]
        %v244 = vld [vmem:[%s118 + $0x340] sm:$0xff]
        %v245 = vld [vmem:[%s118 + $0x348] sm:$0xff]
        %v246 = vld [vmem:[%s118 + $0x350] sm:$0xff]
        %v247 = vld [vmem:[%s118 + $0x358] sm:$0xff]
        %v248 = vld [vmem:[%s118 + $0x360] sm:$0xff]
        %v249 = vld [vmem:[%s118 + $0x368] sm:$0xff]
        %v250 = vld [vmem:[%s118 + $0x370] sm:$0xff]
        %v251 = vld [vmem:[%s118 + $0x378] sm:$0xff]
        %v252 = vld [vmem:[%s118 + $0x380] sm:$0xff]
        %v253 = vld [vmem:[%s118 + $0x388] sm:$0xff]
        %v254 = vld [vmem:[%s118 + $0x390] sm:$0xff]
        %v255 = vld [vmem:[%s118 + $0x398] sm:$0xff]
        %v256 = vld [vmem:[%s118 + $0x3a0] sm:$0xff]
        %v257 = vld [vmem:[%s118 + $0x3a8] sm:$0xff]
        %v258 = vld [vmem:[%s118 + $0x3b0] sm:$0xff]
        %v259 = vld [vmem:[%s118 + $0x3b8] sm:$0xff]
        %v260 = vld [vmem:[%s118 + $0x3c0] sm:$0xff]
        %v261 = vld [vmem:[%s118 + $0x3c8] sm:$0xff]
        %v262 = vld [vmem:[%s118 + $0x3d0] sm:$0xff]
        %v263 = vld [vmem:[%s118 + $0x3d8] sm:$0xff]
        %v264 = vld [vmem:[%s118 + $0x3e0] sm:$0xff]
        %v265 = vld [vmem:[%s118 + $0x3e8] sm:$0xff]
        %v266 = vld [vmem:[%s118 + $0x3f0] sm:$0xff]
        %v267 = vld [vmem:[%s118 + $0x3f8] sm:$0xff]
        %v268 = vld [vmem:[%s118 + $0x400] sm:$0xff]
        %v269 = vld [vmem:[%s118 + $0x408] sm:$0xff]
        %v270 = vld [vmem:[%s118 + $0x410] sm:$0xff]
        %v271 = vld [vmem:[%s118 + $0x418] sm:$0xff]
        %v272 = vld [vmem:[%s118 + $0x420] sm:$0xff]
        %v273 = vld [vmem:[%s118 + $0x428] sm:$0xff]
        %v274 = vld [vmem:[%s118 + $0x430] sm:$0xff]
        %v275 = vld [vmem:[%s118 + $0x438] sm:$0xff]
        %v276 = vld [vmem:[%s118 + $0x440] sm:$0xff]
        %v277 = vld [vmem:[%s118 + $0x448] sm:$0xff]
        %v278 = vld [vmem:[%s118 + $0x450] sm:$0xff]
        %v279 = vld [vmem:[%s118 + $0x458] sm:$0xff]
        %v280 = vld [vmem:[%s118 + $0x460] sm:$0xff]
        %v281 = vld [vmem:[%s118 + $0x468] sm:$0xff]
        %v282 = vld [vmem:[%s118 + $0x470] sm:$0xff]
        %v283 = vld [vmem:[%s118 + $0x478] sm:$0xff]
        %v284 = vld [vmem:[%s118 + $0x480] sm:$0xff]
        %v285 = vld [vmem:[%s118 + $0x488] sm:$0xff]
        %v286 = vld [vmem:[%s118 + $0x490] sm:$0xff]
        %v287 = vld [vmem:[%s118 + $0x498] sm:$0xff]
        %v288 = vld [vmem:[%s118 + $0x4a0] sm:$0xff]
        %v289 = vld [vmem:[%s118 + $0x4a8] sm:$0xff]
        %v290 = vld [vmem:[%s118 + $0x4b0] sm:$0xff]
        %v291 = vld [vmem:[%s118 + $0x4b8] sm:$0xff]
        %v292 = vld [vmem:[%s118 + $0x4c0] sm:$0xff]
        %v293 = vld [vmem:[%s118 + $0x4c8] sm:$0xff]
        %v294 = vld [vmem:[%s118 + $0x4d0] sm:$0xff]
        %v295 = vld [vmem:[%s118 + $0x4d8] sm:$0xff]
        %v296 = vld [vmem:[%s118 + $0x4e0] sm:$0xff]
        %v297 = vld [vmem:[%s118 + $0x4e8] sm:$0xff]
        %v298 = vld [vmem:[%s118 + $0x4f0] sm:$0xff]
        %v299 = vld [vmem:[%s118 + $0x4f8] sm:$0xff]
        %v300 = vld [vmem:[%s118 + $0x500] sm:$0xff]
        %v301 = vld [vmem:[%s118 + $0x508] sm:$0xff]
        %v302 = vld [vmem:[%s118 + $0x510] sm:$0xff]
        %v303 = vld [vmem:[%s118 + $0x518] sm:$0xff]
        %v304 = vld [vmem:[%s118 + $0x520] sm:$0xff]
        %v305 = vld [vmem:[%s118 + $0x528] sm:$0xff]
        %v306 = vld [vmem:[%s118 + $0x530] sm:$0xff]
        %v307 = vld [vmem:[%s118 + $0x538] sm:$0xff]
        %v308 = vld [vmem:[%s118 + $0x540] sm:$0xff]
        %v309 = vld [vmem:[%s118 + $0x548] sm:$0xff]
        %v310 = vld [vmem:[%s118 + $0x550] sm:$0xff]
        %v311 = vld [vmem:[%s118 + $0x558] sm:$0xff]
        %v312 = vld [vmem:[%s118 + $0x560] sm:$0xff]
        %v313 = vld [vmem:[%s118 + $0x568] sm:$0xff]
        %v314 = vld [vmem:[%s118 + $0x570] sm:$0xff]
        %v315 = vld [vmem:[%s118 + $0x578] sm:$0xff]
        %v316 = vld [vmem:[%s118 + $0x580] sm:$0xff]
        %v317 = vld [vmem:[%s118 + $0x588] sm:$0xff]
        %v318 = vld [vmem:[%s118 + $0x590] sm:$0xff]
        %v319 = vld [vmem:[%s118 + $0x598] sm:$0xff]
        %v320 = vld [vmem:[%s118 + $0x5a0] sm:$0xff]
        %v321 = vld [vmem:[%s118 + $0x5a8] sm:$0xff]
        %v322 = vld [vmem:[%s118 + $0x5b0] sm:$0xff]
        %v323 = vld [vmem:[%s118 + $0x5b8] sm:$0xff]
        %v324 = vld [vmem:[%s118 + $0x5c0] sm:$0xff]
        %v325 = vld [vmem:[%s118 + $0x5c8] sm:$0xff]
        %v326 = vld [vmem:[%s118 + $0x5d0] sm:$0xff]
        %v327 = vld [vmem:[%s118 + $0x5d8] sm:$0xff]
        %v328 = vld [vmem:[%s118 + $0x5e0] sm:$0xff]
        %v329 = vld [vmem:[%s118 + $0x5e8] sm:$0xff]
        %v330 = vld [vmem:[%s118 + $0x5f0] sm:$0xff]
        %v331 = vld [vmem:[%s118 + $0x5f8] sm:$0xff]
        %v332 = vld [vmem:[%s118 + $0x600] sm:$0xff]
        %v333 = vld [vmem:[%s118 + $0x608] sm:$0xff]
        %v334 = vld [vmem:[%s118 + $0x610] sm:$0xff]
        %v335 = vld [vmem:[%s118 + $0x618] sm:$0xff]
        %v336 = vld [vmem:[%s118 + $0x620] sm:$0xff]
        %v337 = vld [vmem:[%s118 + $0x628] sm:$0xff]
        %v338 = vld [vmem:[%s118 + $0x630] sm:$0xff]
        %v339 = vld [vmem:[%s118 + $0x638] sm:$0xff]
        %v340 = vld [vmem:[%s118 + $0x640] sm:$0xff]
        %v341 = vld [vmem:[%s118 + $0x648] sm:$0xff]
        %v342 = vld [vmem:[%s118 + $0x650] sm:$0xff]
        %v343 = vld [vmem:[%s118 + $0x658] sm:$0xff]
        %v344 = vld [vmem:[%s118 + $0x660] sm:$0xff]
        %v345 = vld [vmem:[%s118 + $0x668] sm:$0xff]
        %v346 = vld [vmem:[%s118 + $0x670] sm:$0xff]
        %v347 = vld [vmem:[%s118 + $0x678] sm:$0xff]
        %v348 = vld [vmem:[%s118 + $0x680] sm:$0xff]
        %v349 = vld [vmem:[%s118 + $0x688] sm:$0xff]
        %v350 = vld [vmem:[%s118 + $0x690] sm:$0xff]
        %v351 = vld [vmem:[%s118 + $0x698] sm:$0xff]
        %v352 = vld [vmem:[%s118 + $0x6a0] sm:$0xff]
        %v353 = vld [vmem:[%s118 + $0x6a8] sm:$0xff]
        %v354 = vld [vmem:[%s118 + $0x6b0] sm:$0xff]
        %v355 = vld [vmem:[%s118 + $0x6b8] sm:$0xff]
        %v356 = vld [vmem:[%s118 + $0x6c0] sm:$0xff]
        %v357 = vld [vmem:[%s118 + $0x6c8] sm:$0xff]
        %v358 = vld [vmem:[%s118 + $0x6d0] sm:$0xff]
        %v359 = vld [vmem:[%s118 + $0x6d8] sm:$0xff]
        %v360 = vld [vmem:[%s118 + $0x6e0] sm:$0xff]
        %v361 = vld [vmem:[%s118 + $0x6e8] sm:$0xff]
        %v362 = vld [vmem:[%s118 + $0x6f0] sm:$0xff]
        %v363 = vld [vmem:[%s118 + $0x6f8] sm:$0xff]
        %v364 = vld [vmem:[%s118 + $0x700] sm:$0xff]
        %v365 = vld [vmem:[%s118 + $0x708] sm:$0xff]
        %v366 = vld [vmem:[%s118 + $0x710] sm:$0xff]
        %v367 = vld [vmem:[%s118 + $0x718] sm:$0xff]
        %v368 = vld [vmem:[%s118 + $0x720] sm:$0xff]
        %v369 = vld [vmem:[%s118 + $0x728] sm:$0xff]
        %v370 = vld [vmem:[%s118 + $0x730] sm:$0xff]
        %v371 = vld [vmem:[%s118 + $0x738] sm:$0xff]
        %v372 = vld [vmem:[%s118 + $0x740] sm:$0xff]
        %v373 = vld [vmem:[%s118 + $0x748] sm:$0xff]
        %v374 = vld [vmem:[%s118 + $0x750] sm:$0xff]
        %v375 = vld [vmem:[%s118 + $0x758] sm:$0xff]
        %v376 = vld [vmem:[%s118 + $0x760] sm:$0xff]
        %v377 = vld [vmem:[%s118 + $0x768] sm:$0xff]
        %v378 = vld [vmem:[%s118 + $0x770] sm:$0xff]
        %v379 = vld [vmem:[%s118 + $0x778] sm:$0xff]
        %v380 = vld [vmem:[%s118 + $0x780] sm:$0xff]
        %v381 = vld [vmem:[%s118 + $0x788] sm:$0xff]
        %v382 = vld [vmem:[%s118 + $0x790] sm:$0xff]
        %v383 = vld [vmem:[%s118 + $0x798] sm:$0xff]
        %v384 = vld [vmem:[%s118 + $0x7a0] sm:$0xff]
        %v385 = vld [vmem:[%s118 + $0x7a8] sm:$0xff]
        %v386 = vld [vmem:[%s118 + $0x7b0] sm:$0xff]
        %v387 = vld [vmem:[%s118 + $0x7b8] sm:$0xff]
        %v388 = vld [vmem:[%s118 + $0x7c0] sm:$0xff]
        %v389 = vld [vmem:[%s118 + $0x7c8] sm:$0xff]
        %v390 = vld [vmem:[%s118 + $0x7d0] sm:$0xff]
        %v391 = vld [vmem:[%s118 + $0x7d8] sm:$0xff]
        %v392 = vld [vmem:[%s118 + $0x7e0] sm:$0xff]
        %v393 = vld [vmem:[%s118 + $0x7e8] sm:$0xff]
        %v394 = vld [vmem:[%s118 + $0x7f0] sm:$0xff]
        %v395 = vld [vmem:[%s118 + $0x7f8] sm:$0xff]
        %v396 = vld [vmem:[%s118 + $0x800] sm:$0xff]
        %v397 = vld [vmem:[%s118 + $0x808] sm:$0xff]
        %v398 = vld [vmem:[%s118 + $0x810] sm:$0xff]
        %v399 = vld [vmem:[%s118 + $0x818] sm:$0xff]
        %v400 = vld [vmem:[%s118 + $0x820] sm:$0xff]
        %v401 = vld [vmem:[%s118 + $0x828] sm:$0xff]
        %v402 = vld [vmem:[%s118 + $0x830] sm:$0xff]
        %v403 = vld [vmem:[%s118 + $0x838] sm:$0xff]
        %v404 = vld [vmem:[%s118 + $0x840] sm:$0xff]
        %v405 = vld [vmem:[%s118 + $0x848] sm:$0xff]
        %v406 = vld [vmem:[%s118 + $0x850] sm:$0xff]
        %v407 = vld [vmem:[%s118 + $0x858] sm:$0xff]
        %v408 = vld [vmem:[%s118 + $0x860] sm:$0xff]
        %v409 = vld [vmem:[%s118 + $0x868] sm:$0xff]
        %v410 = vld [vmem:[%s118 + $0x870] sm:$0xff]
        %v411 = vld [vmem:[%s118 + $0x878] sm:$0xff]
        %v412 = vld [vmem:[%s118 + $0x880] sm:$0xff]
        %v413 = vld [vmem:[%s118 + $0x888] sm:$0xff]
        %v414 = vld [vmem:[%s118 + $0x890] sm:$0xff]
        %v415 = vld [vmem:[%s118 + $0x898] sm:$0xff]
        %v416 = vld [vmem:[%s118 + $0x8a0] sm:$0xff]
        %v417 = vld [vmem:[%s118 + $0x8a8] sm:$0xff]
        %v418 = vld [vmem:[%s118 + $0x8b0] sm:$0xff]
        %v419 = vld [vmem:[%s118 + $0x8b8] sm:$0xff]
        %v420 = vld [vmem:[%s118 + $0x8c0] sm:$0xff]
        %v421 = vld [vmem:[%s118 + $0x8c8] sm:$0xff]
        %v422 = vld [vmem:[%s118 + $0x8d0] sm:$0xff]
        %v423 = vld [vmem:[%s118 + $0x8d8] sm:$0xff]
        %v424 = vld [vmem:[%s118 + $0x8e0] sm:$0xff]
        %v425 = vld [vmem:[%s118 + $0x8e8] sm:$0xff]
        %v426 = vld [vmem:[%s118 + $0x8f0] sm:$0xff]
        %v427 = vld [vmem:[%s118 + $0x8f8] sm:$0xff]
        %v428 = vld [vmem:[%s118 + $0x900] sm:$0xff]
        %v429 = vld [vmem:[%s118 + $0x908] sm:$0xff]
        %v430 = vld [vmem:[%s118 + $0x910] sm:$0xff]
        %v431 = vld [vmem:[%s118 + $0x918] sm:$0xff]
        %v432 = vld [vmem:[%s118 + $0x920] sm:$0xff]
        %v433 = vld [vmem:[%s118 + $0x928] sm:$0xff]
        %v434 = vld [vmem:[%s118 + $0x930] sm:$0xff]
        %v435 = vld [vmem:[%s118 + $0x938] sm:$0xff]
        %v436 = vld [vmem:[%s118 + $0x940] sm:$0xff]
        %v437 = vld [vmem:[%s118 + $0x948] sm:$0xff]
        %v438 = vld [vmem:[%s118 + $0x950] sm:$0xff]
        %v439 = vld [vmem:[%s118 + $0x958] sm:$0xff]
        %v440 = vld [vmem:[%s118 + $0x960] sm:$0xff]
        %v441 = vld [vmem:[%s118 + $0x968] sm:$0xff]
        %v442 = vld [vmem:[%s118 + $0x970] sm:$0xff]
        %v443 = vld [vmem:[%s118 + $0x978] sm:$0xff]
        %v444 = vld [vmem:[%s118 + $0x980] sm:$0xff]
        %v445 = vld [vmem:[%s118 + $0x988] sm:$0xff]
        %v446 = vld [vmem:[%s118 + $0x990] sm:$0xff]
        %v447 = vld [vmem:[%s118 + $0x998] sm:$0xff]
        %v448 = vld [vmem:[%s118 + $0x9a0] sm:$0xff]
        %v449 = vld [vmem:[%s118 + $0x9a8] sm:$0xff]
        %v450 = vld [vmem:[%s118 + $0x9b0] sm:$0xff]
        %v451 = vld [vmem:[%s118 + $0x9b8] sm:$0xff]
        %v452 = vld [vmem:[%s118 + $0x9c0] sm:$0xff]
        %v453 = vld [vmem:[%s118 + $0x9c8] sm:$0xff]
        %v454 = vld [vmem:[%s118 + $0x9d0] sm:$0xff]
        %v455 = vld [vmem:[%s118 + $0x9d8] sm:$0xff]
        %v456 = vld [vmem:[%s118 + $0x9e0] sm:$0xff]
        %v457 = vld [vmem:[%s118 + $0x9e8] sm:$0xff]
        %v458 = vld [vmem:[%s118 + $0x9f0] sm:$0xff]
        %v459 = vld [vmem:[%s118 + $0x9f8] sm:$0xff]
        %v460 = vld [vmem:[%s118 + $0xa00] sm:$0xff]
        %v461 = vld [vmem:[%s118 + $0xa08] sm:$0xff]
        %v462 = vld [vmem:[%s118 + $0xa10] sm:$0xff]
        %v463 = vld [vmem:[%s118 + $0xa18] sm:$0xff]
        %v464 = vld [vmem:[%s118 + $0xa20] sm:$0xff]
        %v465 = vld [vmem:[%s118 + $0xa28] sm:$0xff]
        %v466 = vld [vmem:[%s118 + $0xa30] sm:$0xff]
        %v467 = vld [vmem:[%s118 + $0xa38] sm:$0xff]
        %v468 = vld [vmem:[%s118 + $0xa40] sm:$0xff]
        %v469 = vld [vmem:[%s118 + $0xa48] sm:$0xff]
        %v470 = vld [vmem:[%s118 + $0xa50] sm:$0xff]
        %v471 = vld [vmem:[%s118 + $0xa58] sm:$0xff]
        %v472 = vld [vmem:[%s118 + $0xa60] sm:$0xff]
        %v473 = vld [vmem:[%s118 + $0xa68] sm:$0xff]
        %v474 = vld [vmem:[%s118 + $0xa70] sm:$0xff]
        %v475 = vld [vmem:[%s118 + $0xa78] sm:$0xff]
        %v476 = vld [vmem:[%s118 + $0xa80] sm:$0xff]
        %v477 = vld [vmem:[%s118 + $0xa88] sm:$0xff]
        %v478 = vld [vmem:[%s118 + $0xa90] sm:$0xff]
        %v479 = vld [vmem:[%s118 + $0xa98] sm:$0xff]
        %v480 = vld [vmem:[%s118 + $0xaa0] sm:$0xff]
        %v481 = vld [vmem:[%s118 + $0xaa8] sm:$0xff]
        %v482 = vld [vmem:[%s118 + $0xab0] sm:$0xff]
        %v483 = vld [vmem:[%s118 + $0xab8] sm:$0xff]
        %v484 = vld [vmem:[%s118 + $0xac0] sm:$0xff]
        %v485 = vld [vmem:[%s118 + $0xac8] sm:$0xff]
        %v486 = vld [vmem:[%s118 + $0xad0] sm:$0xff]
        %v487 = vld [vmem:[%s118 + $0xad8] sm:$0xff]
        %v488 = vld [vmem:[%s118 + $0xae0] sm:$0xff]
        %v489 = vld [vmem:[%s118 + $0xae8] sm:$0xff]
        %v490 = vld [vmem:[%s118 + $0xaf0] sm:$0xff]
        %v491 = vld [vmem:[%s118 + $0xaf8] sm:$0xff]
        %v492 = vld [vmem:[%s118 + $0xb00] sm:$0xff]
        %v493 = vld [vmem:[%s118 + $0xb08] sm:$0xff]
        %v494 = vld [vmem:[%s118 + $0xb10] sm:$0xff]
        %v495 = vld [vmem:[%s118 + $0xb18] sm:$0xff]
        %v496 = vld [vmem:[%s118 + $0xb20] sm:$0xff]
        %v497 = vld [vmem:[%s118 + $0xb28] sm:$0xff]
        %v498 = vld [vmem:[%s118 + $0xb30] sm:$0xff]
        %v499 = vld [vmem:[%s118 + $0xb38] sm:$0xff]
        %v500 = vld [vmem:[%s118 + $0xb40] sm:$0xff]
        %v501 = vld [vmem:[%s118 + $0xb48] sm:$0xff]
        %v502 = vld [vmem:[%s118 + $0xb50] sm:$0xff]
        %v503 = vld [vmem:[%s118 + $0xb58] sm:$0xff]
        %v504 = vld [vmem:[%s118 + $0xb60] sm:$0xff]
        %v505 = vld [vmem:[%s118 + $0xb68] sm:$0xff]
        %v506 = vld [vmem:[%s118 + $0xb70] sm:$0xff]
        %v507 = vld [vmem:[%s118 + $0xb78] sm:$0xff]
        %v508 = vld [vmem:[%s118 + $0xb80] sm:$0xff]
        %v509 = vld [vmem:[%s118 + $0xb88] sm:$0xff]
        %v510 = vld [vmem:[%s118 + $0xb90] sm:$0xff]
        %v511 = vld [vmem:[%s118 + $0xb98] sm:$0xff]
        %v512 = vld [vmem:[%s118 + $0xba0] sm:$0xff]
        %v513 = vld [vmem:[%s118 + $0xba8] sm:$0xff]
        %v514 = vld [vmem:[%s118 + $0xbb0] sm:$0xff]
        %v515 = vld [vmem:[%s118 + $0xbb8] sm:$0xff]
        %v516 = vld [vmem:[%s118 + $0xbc0] sm:$0xff]
        %v517 = vld [vmem:[%s118 + $0xbc8] sm:$0xff]
        %v518 = vld [vmem:[%s118 + $0xbd0] sm:$0xff]
        %v519 = vld [vmem:[%s118 + $0xbd8] sm:$0xff]
        %v520 = vld [vmem:[%s118 + $0xbe0] sm:$0xff]
        %v521 = vld [vmem:[%s118 + $0xbe8] sm:$0xff]
        %v522 = vld [vmem:[%s118 + $0xbf0] sm:$0xff]
        %v523 = vld [vmem:[%s118 + $0xbf8] sm:$0xff]
        %v524 = vtanh.pop %v140
        %v525 = vtanh.pop %v141
        %v526 = vtanh.pop %v142
        %v527 = vtanh.pop %v143
        %v528 = vtanh.pop %v144
        %v529 = vtanh.pop %v145
        %v530 = vtanh.pop %v146
        %v531 = vtanh.pop %v147
        %v532 = vtanh.pop %v148
        %v533 = vtanh.pop %v149
        %v534 = vtanh.pop %v150
        %v535 = vtanh.pop %v151
        %v536 = vtanh.pop %v152
        %v537 = vtanh.pop %v153
        %v538 = vtanh.pop %v154
        %v539 = vtanh.pop %v155
        %v540 = vtanh.pop %v156
        %v541 = vtanh.pop %v157
        %v542 = vtanh.pop %v158
        %v543 = vtanh.pop %v159
        %v544 = vtanh.pop %v160
        %v545 = vtanh.pop %v161
        %v546 = vtanh.pop %v162
        %v547 = vtanh.pop %v163
        %v548 = vtanh.pop %v164
        %v549 = vtanh.pop %v165
        %v550 = vtanh.pop %v166
        %v551 = vtanh.pop %v167
        %v552 = vtanh.pop %v168
        %v553 = vtanh.pop %v169
        %v554 = vtanh.pop %v170
        %v555 = vtanh.pop %v171
        %v556 = vtanh.pop %v172
        %v557 = vtanh.pop %v173
        %v558 = vtanh.pop %v174
        %v559 = vtanh.pop %v175
        %v560 = vtanh.pop %v176
        %v561 = vtanh.pop %v177
        %v562 = vtanh.pop %v178
        %v563 = vtanh.pop %v179
        %v564 = vtanh.pop %v180
        %v565 = vtanh.pop %v181
        %v566 = vtanh.pop %v182
        %v567 = vtanh.pop %v183
        %v568 = vtanh.pop %v184
        %v569 = vtanh.pop %v185
        %v570 = vtanh.pop %v186
        %v571 = vtanh.pop %v187
        %v572 = vtanh.pop %v188
        %v573 = vtanh.pop %v189
        %v574 = vtanh.pop %v190
        %v575 = vtanh.pop %v191
        %v576 = vtanh.pop %v192
        %v577 = vtanh.pop %v193
        %v578 = vtanh.pop %v194
        %v579 = vtanh.pop %v195
        %v580 = vtanh.pop %v196
        %v581 = vtanh.pop %v197
        %v582 = vtanh.pop %v198
        %v583 = vtanh.pop %v199
        %v584 = vtanh.pop %v200
        %v585 = vtanh.pop %v201
        %v586 = vtanh.pop %v202
        %v587 = vtanh.pop %v203
        %v588 = vtanh.pop %v204
        %v589 = vtanh.pop %v205
        %v590 = vtanh.pop %v206
        %v591 = vtanh.pop %v207
        %v592 = vtanh.pop %v208
        %v593 = vtanh.pop %v209
        %v594 = vtanh.pop %v210
        %v595 = vtanh.pop %v211
        %v596 = vtanh.pop %v212
        %v597 = vtanh.pop %v213
        %v598 = vtanh.pop %v214
        %v599 = vtanh.pop %v215
        %v600 = vtanh.pop %v216
        %v601 = vtanh.pop %v217
        %v602 = vtanh.pop %v218
        %v603 = vtanh.pop %v219
        %v604 = vtanh.pop %v220
        %v605 = vtanh.pop %v221
        %v606 = vtanh.pop %v222
        %v607 = vtanh.pop %v223
        %v608 = vtanh.pop %v224
        %v609 = vtanh.pop %v225
        %v610 = vtanh.pop %v226
        %v611 = vtanh.pop %v227
        %v612 = vtanh.pop %v228
        %v613 = vtanh.pop %v229
        %v614 = vtanh.pop %v230
        %v615 = vtanh.pop %v231
        %v616 = vtanh.pop %v232
        %v617 = vtanh.pop %v233
        %v618 = vtanh.pop %v234
        %v619 = vtanh.pop %v235
        %v620 = vtanh.pop %v236
        %v621 = vtanh.pop %v237
        %v622 = vtanh.pop %v238
        %v623 = vtanh.pop %v239
        %v624 = vtanh.pop %v240
        %v625 = vtanh.pop %v241
        %v626 = vtanh.pop %v242
        %v627 = vtanh.pop %v243
        %v628 = vtanh.pop %v244
        %v629 = vtanh.pop %v245
        %v630 = vtanh.pop %v246
        %v631 = vtanh.pop %v247
        %v632 = vtanh.pop %v248
        %v633 = vtanh.pop %v249
        %v634 = vtanh.pop %v250
        %v635 = vtanh.pop %v251
        %v636 = vtanh.pop %v252
        %v637 = vtanh.pop %v253
        %v638 = vtanh.pop %v254
        %v639 = vtanh.pop %v255
        %v640 = vtanh.pop %v256
        %v641 = vtanh.pop %v257
        %v642 = vtanh.pop %v258
        %v643 = vtanh.pop %v259
        %v644 = vtanh.pop %v260
        %v645 = vtanh.pop %v261
        %v646 = vtanh.pop %v262
        %v647 = vtanh.pop %v263
        %v648 = vtanh.pop %v264
        %v649 = vtanh.pop %v265
        %v650 = vtanh.pop %v266
        %v651 = vtanh.pop %v267
        %v652 = vtanh.pop %v268
        %v653 = vtanh.pop %v269
        %v654 = vtanh.pop %v270
        %v655 = vtanh.pop %v271
        %v656 = vtanh.pop %v272
        %v657 = vtanh.pop %v273
        %v658 = vtanh.pop %v274
        %v659 = vtanh.pop %v275
        %v660 = vtanh.pop %v276
        %v661 = vtanh.pop %v277
        %v662 = vtanh.pop %v278
        %v663 = vtanh.pop %v279
        %v664 = vtanh.pop %v280
        %v665 = vtanh.pop %v281
        %v666 = vtanh.pop %v282
        %v667 = vtanh.pop %v283
        %v668 = vtanh.pop %v284
        %v669 = vtanh.pop %v285
        %v670 = vtanh.pop %v286
        %v671 = vtanh.pop %v287
        %v672 = vtanh.pop %v288
        %v673 = vtanh.pop %v289
        %v674 = vtanh.pop %v290
        %v675 = vtanh.pop %v291
        %v676 = vtanh.pop %v292
        %v677 = vtanh.pop %v293
        %v678 = vtanh.pop %v294
        %v679 = vtanh.pop %v295
        %v680 = vtanh.pop %v296
        %v681 = vtanh.pop %v297
        %v682 = vtanh.pop %v298
        %v683 = vtanh.pop %v299
        %v684 = vtanh.pop %v300
        %v685 = vtanh.pop %v301
        %v686 = vtanh.pop %v302
        %v687 = vtanh.pop %v303
        %v688 = vtanh.pop %v304
        %v689 = vtanh.pop %v305
        %v690 = vtanh.pop %v306
        %v691 = vtanh.pop %v307
        %v692 = vtanh.pop %v308
        %v693 = vtanh.pop %v309
        %v694 = vtanh.pop %v310
        %v695 = vtanh.pop %v311
        %v696 = vtanh.pop %v312
        %v697 = vtanh.pop %v313
        %v698 = vtanh.pop %v314
        %v699 = vtanh.pop %v315
        %v700 = vtanh.pop %v316
        %v701 = vtanh.pop %v317
        %v702 = vtanh.pop %v318
        %v703 = vtanh.pop %v319
        %v704 = vtanh.pop %v320
        %v705 = vtanh.pop %v321
        %v706 = vtanh.pop %v322
        %v707 = vtanh.pop %v323
        %v708 = vtanh.pop %v324
        %v709 = vtanh.pop %v325
        %v710 = vtanh.pop %v326
        %v711 = vtanh.pop %v327
        %v712 = vtanh.pop %v328
        %v713 = vtanh.pop %v329
        %v714 = vtanh.pop %v330
        %v715 = vtanh.pop %v331
        %v716 = vtanh.pop %v332
        %v717 = vtanh.pop %v333
        %v718 = vtanh.pop %v334
        %v719 = vtanh.pop %v335
        %v720 = vtanh.pop %v336
        %v721 = vtanh.pop %v337
        %v722 = vtanh.pop %v338
        %v723 = vtanh.pop %v339
        %v724 = vtanh.pop %v340
        %v725 = vtanh.pop %v341
        %v726 = vtanh.pop %v342
        %v727 = vtanh.pop %v343
        %v728 = vtanh.pop %v344
        %v729 = vtanh.pop %v345
        %v730 = vtanh.pop %v346
        %v731 = vtanh.pop %v347
        %v732 = vtanh.pop %v348
        %v733 = vtanh.pop %v349
        %v734 = vtanh.pop %v350
        %v735 = vtanh.pop %v351
        %v736 = vtanh.pop %v352
        %v737 = vtanh.pop %v353
        %v738 = vtanh.pop %v354
        %v739 = vtanh.pop %v355
        %v740 = vtanh.pop %v356
        %v741 = vtanh.pop %v357
        %v742 = vtanh.pop %v358
        %v743 = vtanh.pop %v359
        %v744 = vtanh.pop %v360
        %v745 = vtanh.pop %v361
        %v746 = vtanh.pop %v362
        %v747 = vtanh.pop %v363
        %v748 = vtanh.pop %v364
        %v749 = vtanh.pop %v365
        %v750 = vtanh.pop %v366
        %v751 = vtanh.pop %v367
        %v752 = vtanh.pop %v368
        %v753 = vtanh.pop %v369
        %v754 = vtanh.pop %v370
        %v755 = vtanh.pop %v371
        %v756 = vtanh.pop %v372
        %v757 = vtanh.pop %v373
        %v758 = vtanh.pop %v374
        %v759 = vtanh.pop %v375
        %v760 = vtanh.pop %v376
        %v761 = vtanh.pop %v377
        %v762 = vtanh.pop %v378
        %v763 = vtanh.pop %v379
        %v764 = vtanh.pop %v380
        %v765 = vtanh.pop %v381
        %v766 = vtanh.pop %v382
        %v767 = vtanh.pop %v383
        %v768 = vtanh.pop %v384
        %v769 = vtanh.pop %v385
        %v770 = vtanh.pop %v386
        %v771 = vtanh.pop %v387
        %v772 = vtanh.pop %v388
        %v773 = vtanh.pop %v389
        %v774 = vtanh.pop %v390
        %v775 = vtanh.pop %v391
        %v776 = vtanh.pop %v392
        %v777 = vtanh.pop %v393
        %v778 = vtanh.pop %v394
        %v779 = vtanh.pop %v395
        %v780 = vtanh.pop %v396
        %v781 = vtanh.pop %v397
        %v782 = vtanh.pop %v398
        %v783 = vtanh.pop %v399
        %v784 = vtanh.pop %v400
        %v785 = vtanh.pop %v401
        %v786 = vtanh.pop %v402
        %v787 = vtanh.pop %v403
        %v788 = vtanh.pop %v404
        %v789 = vtanh.pop %v405
        %v790 = vtanh.pop %v406
        %v791 = vtanh.pop %v407
        %v792 = vtanh.pop %v408
        %v793 = vtanh.pop %v409
        %v794 = vtanh.pop %v410
        %v795 = vtanh.pop %v411
        %v796 = vtanh.pop %v412
        %v797 = vtanh.pop %v413
        %v798 = vtanh.pop %v414
        %v799 = vtanh.pop %v415
        %v800 = vtanh.pop %v416
        %v801 = vtanh.pop %v417
        %v802 = vtanh.pop %v418
        %v803 = vtanh.pop %v419
        %v804 = vtanh.pop %v420
        %v805 = vtanh.pop %v421
        %v806 = vtanh.pop %v422
        %v807 = vtanh.pop %v423
        %v808 = vtanh.pop %v424
        %v809 = vtanh.pop %v425
        %v810 = vtanh.pop %v426
        %v811 = vtanh.pop %v427
        %v812 = vtanh.pop %v428
        %v813 = vtanh.pop %v429
        %v814 = vtanh.pop %v430
        %v815 = vtanh.pop %v431
        %v816 = vtanh.pop %v432
        %v817 = vtanh.pop %v433
        %v818 = vtanh.pop %v434
        %v819 = vtanh.pop %v435
        %v820 = vtanh.pop %v436
        %v821 = vtanh.pop %v437
        %v822 = vtanh.pop %v438
        %v823 = vtanh.pop %v439
        %v824 = vtanh.pop %v440
        %v825 = vtanh.pop %v441
        %v826 = vtanh.pop %v442
        %v827 = vtanh.pop %v443
        %v828 = vtanh.pop %v444
        %v829 = vtanh.pop %v445
        %v830 = vtanh.pop %v446
        %v831 = vtanh.pop %v447
        %v832 = vtanh.pop %v448
        %v833 = vtanh.pop %v449
        %v834 = vtanh.pop %v450
        %v835 = vtanh.pop %v451
        %v836 = vtanh.pop %v452
        %v837 = vtanh.pop %v453
        %v838 = vtanh.pop %v454
        %v839 = vtanh.pop %v455
        %v840 = vtanh.pop %v456
        %v841 = vtanh.pop %v457
        %v842 = vtanh.pop %v458
        %v843 = vtanh.pop %v459
        %v844 = vtanh.pop %v460
        %v845 = vtanh.pop %v461
        %v846 = vtanh.pop %v462
        %v847 = vtanh.pop %v463
        %v848 = vtanh.pop %v464
        %v849 = vtanh.pop %v465
        %v850 = vtanh.pop %v466
        %v851 = vtanh.pop %v467
        %v852 = vtanh.pop %v468
        %v853 = vtanh.pop %v469
        %v854 = vtanh.pop %v470
        %v855 = vtanh.pop %v471
        %v856 = vtanh.pop %v472
        %v857 = vtanh.pop %v473
        %v858 = vtanh.pop %v474
        %v859 = vtanh.pop %v475
        %v860 = vtanh.pop %v476
        %v861 = vtanh.pop %v477
        %v862 = vtanh.pop %v478
        %v863 = vtanh.pop %v479
        %v864 = vtanh.pop %v480
        %v865 = vtanh.pop %v481
        %v866 = vtanh.pop %v482
        %v867 = vtanh.pop %v483
        %v868 = vtanh.pop %v484
        %v869 = vtanh.pop %v485
        %v870 = vtanh.pop %v486
        %v871 = vtanh.pop %v487
        %v872 = vtanh.pop %v488
        %v873 = vtanh.pop %v489
        %v874 = vtanh.pop %v490
        %v875 = vtanh.pop %v491
        %v876 = vtanh.pop %v492
        %v877 = vtanh.pop %v493
        %v878 = vtanh.pop %v494
        %v879 = vtanh.pop %v495
        %v880 = vtanh.pop %v496
        %v881 = vtanh.pop %v497
        %v882 = vtanh.pop %v498
        %v883 = vtanh.pop %v499
        %v884 = vtanh.pop %v500
        %v885 = vtanh.pop %v501
        %v886 = vtanh.pop %v502
        %v887 = vtanh.pop %v503
        %v888 = vtanh.pop %v504
        %v889 = vtanh.pop %v505
        %v890 = vtanh.pop %v506
        %v891 = vtanh.pop %v507
        %v892 = vtanh.pop %v508
        %v893 = vtanh.pop %v509
        %v894 = vtanh.pop %v510
        %v895 = vtanh.pop %v511
        %v896 = vtanh.pop %v512
        %v897 = vtanh.pop %v513
        %v898 = vtanh.pop %v514
        %v899 = vtanh.pop %v515
        %v900 = vtanh.pop %v516
        %v901 = vtanh.pop %v517
        %v902 = vtanh.pop %v518
        %v903 = vtanh.pop %v519
        %v904 = vtanh.pop %v520
        %v905 = vtanh.pop %v521
        %v906 = vtanh.pop %v522
        %v907 = vtanh.pop %v523
        %908 = vst [vmem:[%s137] sm:$0xff] %v524
        %909 = vst [vmem:[%s137 + $0x8] sm:$0xff] %v525
        %910 = vst [vmem:[%s137 + $0x10] sm:$0xff] %v526
        %911 = vst [vmem:[%s137 + $0x18] sm:$0xff] %v527
        %912 = vst [vmem:[%s137 + $0x20] sm:$0xff] %v528
        %913 = vst [vmem:[%s137 + $0x28] sm:$0xff] %v529
        %914 = vst [vmem:[%s137 + $0x30] sm:$0xff] %v530
        %915 = vst [vmem:[%s137 + $0x38] sm:$0xff] %v531
        %916 = vst [vmem:[%s137 + $0x40] sm:$0xff] %v532
        %917 = vst [vmem:[%s137 + $0x48] sm:$0xff] %v533
        %918 = vst [vmem:[%s137 + $0x50] sm:$0xff] %v534
        %919 = vst [vmem:[%s137 + $0x58] sm:$0xff] %v535
        %920 = vst [vmem:[%s137 + $0x60] sm:$0xff] %v536
        %921 = vst [vmem:[%s137 + $0x68] sm:$0xff] %v537
        %922 = vst [vmem:[%s137 + $0x70] sm:$0xff] %v538
        %923 = vst [vmem:[%s137 + $0x78] sm:$0xff] %v539
        %924 = vst [vmem:[%s137 + $0x80] sm:$0xff] %v540
        %925 = vst [vmem:[%s137 + $0x88] sm:$0xff] %v541
        %926 = vst [vmem:[%s137 + $0x90] sm:$0xff] %v542
        %927 = vst [vmem:[%s137 + $0x98] sm:$0xff] %v543
        %928 = vst [vmem:[%s137 + $0xa0] sm:$0xff] %v544
        %929 = vst [vmem:[%s137 + $0xa8] sm:$0xff] %v545
        %930 = vst [vmem:[%s137 + $0xb0] sm:$0xff] %v546
        %931 = vst [vmem:[%s137 + $0xb8] sm:$0xff] %v547
        %932 = vst [vmem:[%s137 + $0xc0] sm:$0xff] %v548
        %933 = vst [vmem:[%s137 + $0xc8] sm:$0xff] %v549
        %934 = vst [vmem:[%s137 + $0xd0] sm:$0xff] %v550
        %935 = vst [vmem:[%s137 + $0xd8] sm:$0xff] %v551
        %936 = vst [vmem:[%s137 + $0xe0] sm:$0xff] %v552
        %937 = vst [vmem:[%s137 + $0xe8] sm:$0xff] %v553
        %938 = vst [vmem:[%s137 + $0xf0] sm:$0xff] %v554
        %939 = vst [vmem:[%s137 + $0xf8] sm:$0xff] %v555
        %940 = vst [vmem:[%s137 + $0x100] sm:$0xff] %v556
        %941 = vst [vmem:[%s137 + $0x108] sm:$0xff] %v557
        %942 = vst [vmem:[%s137 + $0x110] sm:$0xff] %v558
        %943 = vst [vmem:[%s137 + $0x118] sm:$0xff] %v559
        %944 = vst [vmem:[%s137 + $0x120] sm:$0xff] %v560
        %945 = vst [vmem:[%s137 + $0x128] sm:$0xff] %v561
        %946 = vst [vmem:[%s137 + $0x130] sm:$0xff] %v562
        %947 = vst [vmem:[%s137 + $0x138] sm:$0xff] %v563
        %948 = vst [vmem:[%s137 + $0x140] sm:$0xff] %v564
        %949 = vst [vmem:[%s137 + $0x148] sm:$0xff] %v565
        %950 = vst [vmem:[%s137 + $0x150] sm:$0xff] %v566
        %951 = vst [vmem:[%s137 + $0x158] sm:$0xff] %v567
        %952 = vst [vmem:[%s137 + $0x160] sm:$0xff] %v568
        %953 = vst [vmem:[%s137 + $0x168] sm:$0xff] %v569
        %954 = vst [vmem:[%s137 + $0x170] sm:$0xff] %v570
        %955 = vst [vmem:[%s137 + $0x178] sm:$0xff] %v571
        %956 = vst [vmem:[%s137 + $0x180] sm:$0xff] %v572
        %957 = vst [vmem:[%s137 + $0x188] sm:$0xff] %v573
        %958 = vst [vmem:[%s137 + $0x190] sm:$0xff] %v574
        %959 = vst [vmem:[%s137 + $0x198] sm:$0xff] %v575
        %960 = vst [vmem:[%s137 + $0x1a0] sm:$0xff] %v576
        %961 = vst [vmem:[%s137 + $0x1a8] sm:$0xff] %v577
        %962 = vst [vmem:[%s137 + $0x1b0] sm:$0xff] %v578
        %963 = vst [vmem:[%s137 + $0x1b8] sm:$0xff] %v579
        %964 = vst [vmem:[%s137 + $0x1c0] sm:$0xff] %v580
        %965 = vst [vmem:[%s137 + $0x1c8] sm:$0xff] %v581
        %966 = vst [vmem:[%s137 + $0x1d0] sm:$0xff] %v582
        %967 = vst [vmem:[%s137 + $0x1d8] sm:$0xff] %v583
        %968 = vst [vmem:[%s137 + $0x1e0] sm:$0xff] %v584
        %969 = vst [vmem:[%s137 + $0x1e8] sm:$0xff] %v585
        %970 = vst [vmem:[%s137 + $0x1f0] sm:$0xff] %v586
        %971 = vst [vmem:[%s137 + $0x1f8] sm:$0xff] %v587
        %972 = vst [vmem:[%s137 + $0x200] sm:$0xff] %v588
        %973 = vst [vmem:[%s137 + $0x208] sm:$0xff] %v589
        %974 = vst [vmem:[%s137 + $0x210] sm:$0xff] %v590
        %975 = vst [vmem:[%s137 + $0x218] sm:$0xff] %v591
        %976 = vst [vmem:[%s137 + $0x220] sm:$0xff] %v592
        %977 = vst [vmem:[%s137 + $0x228] sm:$0xff] %v593
        %978 = vst [vmem:[%s137 + $0x230] sm:$0xff] %v594
        %979 = vst [vmem:[%s137 + $0x238] sm:$0xff] %v595
        %980 = vst [vmem:[%s137 + $0x240] sm:$0xff] %v596
        %981 = vst [vmem:[%s137 + $0x248] sm:$0xff] %v597
        %982 = vst [vmem:[%s137 + $0x250] sm:$0xff] %v598
        %983 = vst [vmem:[%s137 + $0x258] sm:$0xff] %v599
        %984 = vst [vmem:[%s137 + $0x260] sm:$0xff] %v600
        %985 = vst [vmem:[%s137 + $0x268] sm:$0xff] %v601
        %986 = vst [vmem:[%s137 + $0x270] sm:$0xff] %v602
        %987 = vst [vmem:[%s137 + $0x278] sm:$0xff] %v603
        %988 = vst [vmem:[%s137 + $0x280] sm:$0xff] %v604
        %989 = vst [vmem:[%s137 + $0x288] sm:$0xff] %v605
        %990 = vst [vmem:[%s137 + $0x290] sm:$0xff] %v606
        %991 = vst [vmem:[%s137 + $0x298] sm:$0xff] %v607
        %992 = vst [vmem:[%s137 + $0x2a0] sm:$0xff] %v608
        %993 = vst [vmem:[%s137 + $0x2a8] sm:$0xff] %v609
        %994 = vst [vmem:[%s137 + $0x2b0] sm:$0xff] %v610
        %995 = vst [vmem:[%s137 + $0x2b8] sm:$0xff] %v611
        %996 = vst [vmem:[%s137 + $0x2c0] sm:$0xff] %v612
        %997 = vst [vmem:[%s137 + $0x2c8] sm:$0xff] %v613
        %998 = vst [vmem:[%s137 + $0x2d0] sm:$0xff] %v614
        %999 = vst [vmem:[%s137 + $0x2d8] sm:$0xff] %v615
        %1000 = vst [vmem:[%s137 + $0x2e0] sm:$0xff] %v616
        %1001 = vst [vmem:[%s137 + $0x2e8] sm:$0xff] %v617
        %1002 = vst [vmem:[%s137 + $0x2f0] sm:$0xff] %v618
        %1003 = vst [vmem:[%s137 + $0x2f8] sm:$0xff] %v619
        %1004 = vst [vmem:[%s137 + $0x300] sm:$0xff] %v620
        %1005 = vst [vmem:[%s137 + $0x308] sm:$0xff] %v621
        %1006 = vst [vmem:[%s137 + $0x310] sm:$0xff] %v622
        %1007 = vst [vmem:[%s137 + $0x318] sm:$0xff] %v623
        %1008 = vst [vmem:[%s137 + $0x320] sm:$0xff] %v624
        %1009 = vst [vmem:[%s137 + $0x328] sm:$0xff] %v625
        %1010 = vst [vmem:[%s137 + $0x330] sm:$0xff] %v626
        %1011 = vst [vmem:[%s137 + $0x338] sm:$0xff] %v627
        %1012 = vst [vmem:[%s137 + $0x340] sm:$0xff] %v628
        %1013 = vst [vmem:[%s137 + $0x348] sm:$0xff] %v629
        %1014 = vst [vmem:[%s137 + $0x350] sm:$0xff] %v630
        %1015 = vst [vmem:[%s137 + $0x358] sm:$0xff] %v631
        %1016 = vst [vmem:[%s137 + $0x360] sm:$0xff] %v632
        %1017 = vst [vmem:[%s137 + $0x368] sm:$0xff] %v633
        %1018 = vst [vmem:[%s137 + $0x370] sm:$0xff] %v634
        %1019 = vst [vmem:[%s137 + $0x378] sm:$0xff] %v635
        %1020 = vst [vmem:[%s137 + $0x380] sm:$0xff] %v636
        %1021 = vst [vmem:[%s137 + $0x388] sm:$0xff] %v637
        %1022 = vst [vmem:[%s137 + $0x390] sm:$0xff] %v638
        %1023 = vst [vmem:[%s137 + $0x398] sm:$0xff] %v639
        %1024 = vst [vmem:[%s137 + $0x3a0] sm:$0xff] %v640
        %1025 = vst [vmem:[%s137 + $0x3a8] sm:$0xff] %v641
        %1026 = vst [vmem:[%s137 + $0x3b0] sm:$0xff] %v642
        %1027 = vst [vmem:[%s137 + $0x3b8] sm:$0xff] %v643
        %1028 = vst [vmem:[%s137 + $0x3c0] sm:$0xff] %v644
        %1029 = vst [vmem:[%s137 + $0x3c8] sm:$0xff] %v645
        %1030 = vst [vmem:[%s137 + $0x3d0] sm:$0xff] %v646
        %1031 = vst [vmem:[%s137 + $0x3d8] sm:$0xff] %v647
        %1032 = vst [vmem:[%s137 + $0x3e0] sm:$0xff] %v648
        %1033 = vst [vmem:[%s137 + $0x3e8] sm:$0xff] %v649
        %1034 = vst [vmem:[%s137 + $0x3f0] sm:$0xff] %v650
        %1035 = vst [vmem:[%s137 + $0x3f8] sm:$0xff] %v651
        %1036 = vst [vmem:[%s137 + $0x400] sm:$0xff] %v652
        %1037 = vst [vmem:[%s137 + $0x408] sm:$0xff] %v653
        %1038 = vst [vmem:[%s137 + $0x410] sm:$0xff] %v654
        %1039 = vst [vmem:[%s137 + $0x418] sm:$0xff] %v655
        %1040 = vst [vmem:[%s137 + $0x420] sm:$0xff] %v656
        %1041 = vst [vmem:[%s137 + $0x428] sm:$0xff] %v657
        %1042 = vst [vmem:[%s137 + $0x430] sm:$0xff] %v658
        %1043 = vst [vmem:[%s137 + $0x438] sm:$0xff] %v659
        %1044 = vst [vmem:[%s137 + $0x440] sm:$0xff] %v660
        %1045 = vst [vmem:[%s137 + $0x448] sm:$0xff] %v661
        %1046 = vst [vmem:[%s137 + $0x450] sm:$0xff] %v662
        %1047 = vst [vmem:[%s137 + $0x458] sm:$0xff] %v663
        %1048 = vst [vmem:[%s137 + $0x460] sm:$0xff] %v664
        %1049 = vst [vmem:[%s137 + $0x468] sm:$0xff] %v665
        %1050 = vst [vmem:[%s137 + $0x470] sm:$0xff] %v666
        %1051 = vst [vmem:[%s137 + $0x478] sm:$0xff] %v667
        %1052 = vst [vmem:[%s137 + $0x480] sm:$0xff] %v668
        %1053 = vst [vmem:[%s137 + $0x488] sm:$0xff] %v669
        %1054 = vst [vmem:[%s137 + $0x490] sm:$0xff] %v670
        %1055 = vst [vmem:[%s137 + $0x498] sm:$0xff] %v671
        %1056 = vst [vmem:[%s137 + $0x4a0] sm:$0xff] %v672
        %1057 = vst [vmem:[%s137 + $0x4a8] sm:$0xff] %v673
        %1058 = vst [vmem:[%s137 + $0x4b0] sm:$0xff] %v674
        %1059 = vst [vmem:[%s137 + $0x4b8] sm:$0xff] %v675
        %1060 = vst [vmem:[%s137 + $0x4c0] sm:$0xff] %v676
        %1061 = vst [vmem:[%s137 + $0x4c8] sm:$0xff] %v677
        %1062 = vst [vmem:[%s137 + $0x4d0] sm:$0xff] %v678
        %1063 = vst [vmem:[%s137 + $0x4d8] sm:$0xff] %v679
        %1064 = vst [vmem:[%s137 + $0x4e0] sm:$0xff] %v680
        %1065 = vst [vmem:[%s137 + $0x4e8] sm:$0xff] %v681
        %1066 = vst [vmem:[%s137 + $0x4f0] sm:$0xff] %v682
        %1067 = vst [vmem:[%s137 + $0x4f8] sm:$0xff] %v683
        %1068 = vst [vmem:[%s137 + $0x500] sm:$0xff] %v684
        %1069 = vst [vmem:[%s137 + $0x508] sm:$0xff] %v685
        %1070 = vst [vmem:[%s137 + $0x510] sm:$0xff] %v686
        %1071 = vst [vmem:[%s137 + $0x518] sm:$0xff] %v687
        %1072 = vst [vmem:[%s137 + $0x520] sm:$0xff] %v688
        %1073 = vst [vmem:[%s137 + $0x528] sm:$0xff] %v689
        %1074 = vst [vmem:[%s137 + $0x530] sm:$0xff] %v690
        %1075 = vst [vmem:[%s137 + $0x538] sm:$0xff] %v691
        %1076 = vst [vmem:[%s137 + $0x540] sm:$0xff] %v692
        %1077 = vst [vmem:[%s137 + $0x548] sm:$0xff] %v693
        %1078 = vst [vmem:[%s137 + $0x550] sm:$0xff] %v694
        %1079 = vst [vmem:[%s137 + $0x558] sm:$0xff] %v695
        %1080 = vst [vmem:[%s137 + $0x560] sm:$0xff] %v696
        %1081 = vst [vmem:[%s137 + $0x568] sm:$0xff] %v697
        %1082 = vst [vmem:[%s137 + $0x570] sm:$0xff] %v698
        %1083 = vst [vmem:[%s137 + $0x578] sm:$0xff] %v699
        %1084 = vst [vmem:[%s137 + $0x580] sm:$0xff] %v700
        %1085 = vst [vmem:[%s137 + $0x588] sm:$0xff] %v701
        %1086 = vst [vmem:[%s137 + $0x590] sm:$0xff] %v702
        %1087 = vst [vmem:[%s137 + $0x598] sm:$0xff] %v703
        %1088 = vst [vmem:[%s137 + $0x5a0] sm:$0xff] %v704
        %1089 = vst [vmem:[%s137 + $0x5a8] sm:$0xff] %v705
        %1090 = vst [vmem:[%s137 + $0x5b0] sm:$0xff] %v706
        %1091 = vst [vmem:[%s137 + $0x5b8] sm:$0xff] %v707
        %1092 = vst [vmem:[%s137 + $0x5c0] sm:$0xff] %v708
        %1093 = vst [vmem:[%s137 + $0x5c8] sm:$0xff] %v709
        %1094 = vst [vmem:[%s137 + $0x5d0] sm:$0xff] %v710
        %1095 = vst [vmem:[%s137 + $0x5d8] sm:$0xff] %v711
        %1096 = vst [vmem:[%s137 + $0x5e0] sm:$0xff] %v712
        %1097 = vst [vmem:[%s137 + $0x5e8] sm:$0xff] %v713
        %1098 = vst [vmem:[%s137 + $0x5f0] sm:$0xff] %v714
        %1099 = vst [vmem:[%s137 + $0x5f8] sm:$0xff] %v715
        %1100 = vst [vmem:[%s137 + $0x600] sm:$0xff] %v716
        %1101 = vst [vmem:[%s137 + $0x608] sm:$0xff] %v717
        %1102 = vst [vmem:[%s137 + $0x610] sm:$0xff] %v718
        %1103 = vst [vmem:[%s137 + $0x618] sm:$0xff] %v719
        %1104 = vst [vmem:[%s137 + $0x620] sm:$0xff] %v720
        %1105 = vst [vmem:[%s137 + $0x628] sm:$0xff] %v721
        %1106 = vst [vmem:[%s137 + $0x630] sm:$0xff] %v722
        %1107 = vst [vmem:[%s137 + $0x638] sm:$0xff] %v723
        %1108 = vst [vmem:[%s137 + $0x640] sm:$0xff] %v724
        %1109 = vst [vmem:[%s137 + $0x648] sm:$0xff] %v725
        %1110 = vst [vmem:[%s137 + $0x650] sm:$0xff] %v726
        %1111 = vst [vmem:[%s137 + $0x658] sm:$0xff] %v727
        %1112 = vst [vmem:[%s137 + $0x660] sm:$0xff] %v728
        %1113 = vst [vmem:[%s137 + $0x668] sm:$0xff] %v729
        %1114 = vst [vmem:[%s137 + $0x670] sm:$0xff] %v730
        %1115 = vst [vmem:[%s137 + $0x678] sm:$0xff] %v731
        %1116 = vst [vmem:[%s137 + $0x680] sm:$0xff] %v732
        %1117 = vst [vmem:[%s137 + $0x688] sm:$0xff] %v733
        %1118 = vst [vmem:[%s137 + $0x690] sm:$0xff] %v734
        %1119 = vst [vmem:[%s137 + $0x698] sm:$0xff] %v735
        %1120 = vst [vmem:[%s137 + $0x6a0] sm:$0xff] %v736
        %1121 = vst [vmem:[%s137 + $0x6a8] sm:$0xff] %v737
        %1122 = vst [vmem:[%s137 + $0x6b0] sm:$0xff] %v738
        %1123 = vst [vmem:[%s137 + $0x6b8] sm:$0xff] %v739
        %1124 = vst [vmem:[%s137 + $0x6c0] sm:$0xff] %v740
        %1125 = vst [vmem:[%s137 + $0x6c8] sm:$0xff] %v741
        %1126 = vst [vmem:[%s137 + $0x6d0] sm:$0xff] %v742
        %1127 = vst [vmem:[%s137 + $0x6d8] sm:$0xff] %v743
        %1128 = vst [vmem:[%s137 + $0x6e0] sm:$0xff] %v744
        %1129 = vst [vmem:[%s137 + $0x6e8] sm:$0xff] %v745
        %1130 = vst [vmem:[%s137 + $0x6f0] sm:$0xff] %v746
        %1131 = vst [vmem:[%s137 + $0x6f8] sm:$0xff] %v747
        %1132 = vst [vmem:[%s137 + $0x700] sm:$0xff] %v748
        %1133 = vst [vmem:[%s137 + $0x708] sm:$0xff] %v749
        %1134 = vst [vmem:[%s137 + $0x710] sm:$0xff] %v750
        %1135 = vst [vmem:[%s137 + $0x718] sm:$0xff] %v751
        %1136 = vst [vmem:[%s137 + $0x720] sm:$0xff] %v752
        %1137 = vst [vmem:[%s137 + $0x728] sm:$0xff] %v753
        %1138 = vst [vmem:[%s137 + $0x730] sm:$0xff] %v754
        %1139 = vst [vmem:[%s137 + $0x738] sm:$0xff] %v755
        %1140 = vst [vmem:[%s137 + $0x740] sm:$0xff] %v756
        %1141 = vst [vmem:[%s137 + $0x748] sm:$0xff] %v757
        %1142 = vst [vmem:[%s137 + $0x750] sm:$0xff] %v758
        %1143 = vst [vmem:[%s137 + $0x758] sm:$0xff] %v759
        %1144 = vst [vmem:[%s137 + $0x760] sm:$0xff] %v760
        %1145 = vst [vmem:[%s137 + $0x768] sm:$0xff] %v761
        %1146 = vst [vmem:[%s137 + $0x770] sm:$0xff] %v762
        %1147 = vst [vmem:[%s137 + $0x778] sm:$0xff] %v763
        %1148 = vst [vmem:[%s137 + $0x780] sm:$0xff] %v764
        %1149 = vst [vmem:[%s137 + $0x788] sm:$0xff] %v765
        %1150 = vst [vmem:[%s137 + $0x790] sm:$0xff] %v766
        %1151 = vst [vmem:[%s137 + $0x798] sm:$0xff] %v767
        %1152 = vst [vmem:[%s137 + $0x7a0] sm:$0xff] %v768
        %1153 = vst [vmem:[%s137 + $0x7a8] sm:$0xff] %v769
        %1154 = vst [vmem:[%s137 + $0x7b0] sm:$0xff] %v770
        %1155 = vst [vmem:[%s137 + $0x7b8] sm:$0xff] %v771
        %1156 = vst [vmem:[%s137 + $0x7c0] sm:$0xff] %v772
        %1157 = vst [vmem:[%s137 + $0x7c8] sm:$0xff] %v773
        %1158 = vst [vmem:[%s137 + $0x7d0] sm:$0xff] %v774
        %1159 = vst [vmem:[%s137 + $0x7d8] sm:$0xff] %v775
        %1160 = vst [vmem:[%s137 + $0x7e0] sm:$0xff] %v776
        %1161 = vst [vmem:[%s137 + $0x7e8] sm:$0xff] %v777
        %1162 = vst [vmem:[%s137 + $0x7f0] sm:$0xff] %v778
        %1163 = vst [vmem:[%s137 + $0x7f8] sm:$0xff] %v779
        %1164 = vst [vmem:[%s137 + $0x800] sm:$0xff] %v780
        %1165 = vst [vmem:[%s137 + $0x808] sm:$0xff] %v781
        %1166 = vst [vmem:[%s137 + $0x810] sm:$0xff] %v782
        %1167 = vst [vmem:[%s137 + $0x818] sm:$0xff] %v783
        %1168 = vst [vmem:[%s137 + $0x820] sm:$0xff] %v784
        %1169 = vst [vmem:[%s137 + $0x828] sm:$0xff] %v785
        %1170 = vst [vmem:[%s137 + $0x830] sm:$0xff] %v786
        %1171 = vst [vmem:[%s137 + $0x838] sm:$0xff] %v787
        %1172 = vst [vmem:[%s137 + $0x840] sm:$0xff] %v788
        %1173 = vst [vmem:[%s137 + $0x848] sm:$0xff] %v789
        %1174 = vst [vmem:[%s137 + $0x850] sm:$0xff] %v790
        %1175 = vst [vmem:[%s137 + $0x858] sm:$0xff] %v791
        %1176 = vst [vmem:[%s137 + $0x860] sm:$0xff] %v792
        %1177 = vst [vmem:[%s137 + $0x868] sm:$0xff] %v793
        %1178 = vst [vmem:[%s137 + $0x870] sm:$0xff] %v794
        %1179 = vst [vmem:[%s137 + $0x878] sm:$0xff] %v795
        %1180 = vst [vmem:[%s137 + $0x880] sm:$0xff] %v796
        %1181 = vst [vmem:[%s137 + $0x888] sm:$0xff] %v797
        %1182 = vst [vmem:[%s137 + $0x890] sm:$0xff] %v798
        %1183 = vst [vmem:[%s137 + $0x898] sm:$0xff] %v799
        %1184 = vst [vmem:[%s137 + $0x8a0] sm:$0xff] %v800
        %1185 = vst [vmem:[%s137 + $0x8a8] sm:$0xff] %v801
        %1186 = vst [vmem:[%s137 + $0x8b0] sm:$0xff] %v802
        %1187 = vst [vmem:[%s137 + $0x8b8] sm:$0xff] %v803
        %1188 = vst [vmem:[%s137 + $0x8c0] sm:$0xff] %v804
        %1189 = vst [vmem:[%s137 + $0x8c8] sm:$0xff] %v805
        %1190 = vst [vmem:[%s137 + $0x8d0] sm:$0xff] %v806
        %1191 = vst [vmem:[%s137 + $0x8d8] sm:$0xff] %v807
        %1192 = vst [vmem:[%s137 + $0x8e0] sm:$0xff] %v808
        %1193 = vst [vmem:[%s137 + $0x8e8] sm:$0xff] %v809
        %1194 = vst [vmem:[%s137 + $0x8f0] sm:$0xff] %v810
        %1195 = vst [vmem:[%s137 + $0x8f8] sm:$0xff] %v811
        %1196 = vst [vmem:[%s137 + $0x900] sm:$0xff] %v812
        %1197 = vst [vmem:[%s137 + $0x908] sm:$0xff] %v813
        %1198 = vst [vmem:[%s137 + $0x910] sm:$0xff] %v814
        %1199 = vst [vmem:[%s137 + $0x918] sm:$0xff] %v815
        %1200 = vst [vmem:[%s137 + $0x920] sm:$0xff] %v816
        %1201 = vst [vmem:[%s137 + $0x928] sm:$0xff] %v817
        %1202 = vst [vmem:[%s137 + $0x930] sm:$0xff] %v818
        %1203 = vst [vmem:[%s137 + $0x938] sm:$0xff] %v819
        %1204 = vst [vmem:[%s137 + $0x940] sm:$0xff] %v820
        %1205 = vst [vmem:[%s137 + $0x948] sm:$0xff] %v821
        %1206 = vst [vmem:[%s137 + $0x950] sm:$0xff] %v822
        %1207 = vst [vmem:[%s137 + $0x958] sm:$0xff] %v823
        %1208 = vst [vmem:[%s137 + $0x960] sm:$0xff] %v824
        %1209 = vst [vmem:[%s137 + $0x968] sm:$0xff] %v825
        %1210 = vst [vmem:[%s137 + $0x970] sm:$0xff] %v826
        %1211 = vst [vmem:[%s137 + $0x978] sm:$0xff] %v827
        %1212 = vst [vmem:[%s137 + $0x980] sm:$0xff] %v828
        %1213 = vst [vmem:[%s137 + $0x988] sm:$0xff] %v829
        %1214 = vst [vmem:[%s137 + $0x990] sm:$0xff] %v830
        %1215 = vst [vmem:[%s137 + $0x998] sm:$0xff] %v831
        %1216 = vst [vmem:[%s137 + $0x9a0] sm:$0xff] %v832
        %1217 = vst [vmem:[%s137 + $0x9a8] sm:$0xff] %v833
        %1218 = vst [vmem:[%s137 + $0x9b0] sm:$0xff] %v834
        %1219 = vst [vmem:[%s137 + $0x9b8] sm:$0xff] %v835
        %1220 = vst [vmem:[%s137 + $0x9c0] sm:$0xff] %v836
        %1221 = vst [vmem:[%s137 + $0x9c8] sm:$0xff] %v837
        %1222 = vst [vmem:[%s137 + $0x9d0] sm:$0xff] %v838
        %1223 = vst [vmem:[%s137 + $0x9d8] sm:$0xff] %v839
        %1224 = vst [vmem:[%s137 + $0x9e0] sm:$0xff] %v840
        %1225 = vst [vmem:[%s137 + $0x9e8] sm:$0xff] %v841
        %1226 = vst [vmem:[%s137 + $0x9f0] sm:$0xff] %v842
        %1227 = vst [vmem:[%s137 + $0x9f8] sm:$0xff] %v843
        %1228 = vst [vmem:[%s137 + $0xa00] sm:$0xff] %v844
        %1229 = vst [vmem:[%s137 + $0xa08] sm:$0xff] %v845
        %1230 = vst [vmem:[%s137 + $0xa10] sm:$0xff] %v846
        %1231 = vst [vmem:[%s137 + $0xa18] sm:$0xff] %v847
        %1232 = vst [vmem:[%s137 + $0xa20] sm:$0xff] %v848
        %1233 = vst [vmem:[%s137 + $0xa28] sm:$0xff] %v849
        %1234 = vst [vmem:[%s137 + $0xa30] sm:$0xff] %v850
        %1235 = vst [vmem:[%s137 + $0xa38] sm:$0xff] %v851
        %1236 = vst [vmem:[%s137 + $0xa40] sm:$0xff] %v852
        %1237 = vst [vmem:[%s137 + $0xa48] sm:$0xff] %v853
        %1238 = vst [vmem:[%s137 + $0xa50] sm:$0xff] %v854
        %1239 = vst [vmem:[%s137 + $0xa58] sm:$0xff] %v855
        %1240 = vst [vmem:[%s137 + $0xa60] sm:$0xff] %v856
        %1241 = vst [vmem:[%s137 + $0xa68] sm:$0xff] %v857
        %1242 = vst [vmem:[%s137 + $0xa70] sm:$0xff] %v858
        %1243 = vst [vmem:[%s137 + $0xa78] sm:$0xff] %v859
        %1244 = vst [vmem:[%s137 + $0xa80] sm:$0xff] %v860
        %1245 = vst [vmem:[%s137 + $0xa88] sm:$0xff] %v861
        %1246 = vst [vmem:[%s137 + $0xa90] sm:$0xff] %v862
        %1247 = vst [vmem:[%s137 + $0xa98] sm:$0xff] %v863
        %1248 = vst [vmem:[%s137 + $0xaa0] sm:$0xff] %v864
        %1249 = vst [vmem:[%s137 + $0xaa8] sm:$0xff] %v865
        %1250 = vst [vmem:[%s137 + $0xab0] sm:$0xff] %v866
        %1251 = vst [vmem:[%s137 + $0xab8] sm:$0xff] %v867
        %1252 = vst [vmem:[%s137 + $0xac0] sm:$0xff] %v868
        %1253 = vst [vmem:[%s137 + $0xac8] sm:$0xff] %v869
        %1254 = vst [vmem:[%s137 + $0xad0] sm:$0xff] %v870
        %1255 = vst [vmem:[%s137 + $0xad8] sm:$0xff] %v871
        %1256 = vst [vmem:[%s137 + $0xae0] sm:$0xff] %v872
        %1257 = vst [vmem:[%s137 + $0xae8] sm:$0xff] %v873
        %1258 = vst [vmem:[%s137 + $0xaf0] sm:$0xff] %v874
        %1259 = vst [vmem:[%s137 + $0xaf8] sm:$0xff] %v875
        %1260 = vst [vmem:[%s137 + $0xb00] sm:$0xff] %v876
        %1261 = vst [vmem:[%s137 + $0xb08] sm:$0xff] %v877
        %1262 = vst [vmem:[%s137 + $0xb10] sm:$0xff] %v878
        %1263 = vst [vmem:[%s137 + $0xb18] sm:$0xff] %v879
        %1264 = vst [vmem:[%s137 + $0xb20] sm:$0xff] %v880
        %1265 = vst [vmem:[%s137 + $0xb28] sm:$0xff] %v881
        %1266 = vst [vmem:[%s137 + $0xb30] sm:$0xff] %v882
        %1267 = vst [vmem:[%s137 + $0xb38] sm:$0xff] %v883
        %1268 = vst [vmem:[%s137 + $0xb40] sm:$0xff] %v884
        %1269 = vst [vmem:[%s137 + $0xb48] sm:$0xff] %v885
        %1270 = vst [vmem:[%s137 + $0xb50] sm:$0xff] %v886
        %1271 = vst [vmem:[%s137 + $0xb58] sm:$0xff] %v887
        %1272 = vst [vmem:[%s137 + $0xb60] sm:$0xff] %v888
        %1273 = vst [vmem:[%s137 + $0xb68] sm:$0xff] %v889
        %1274 = vst [vmem:[%s137 + $0xb70] sm:$0xff] %v890
        %1275 = vst [vmem:[%s137 + $0xb78] sm:$0xff] %v891
        %1276 = vst [vmem:[%s137 + $0xb80] sm:$0xff] %v892
        %1277 = vst [vmem:[%s137 + $0xb88] sm:$0xff] %v893
        %1278 = vst [vmem:[%s137 + $0xb90] sm:$0xff] %v894
        %1279 = vst [vmem:[%s137 + $0xb98] sm:$0xff] %v895
        %1280 = vst [vmem:[%s137 + $0xba0] sm:$0xff] %v896
        %1281 = vst [vmem:[%s137 + $0xba8] sm:$0xff] %v897
        %1282 = vst [vmem:[%s137 + $0xbb0] sm:$0xff] %v898
        %1283 = vst [vmem:[%s137 + $0xbb8] sm:$0xff] %v899
        %1284 = vst [vmem:[%s137 + $0xbc0] sm:$0xff] %v900
        %1285 = vst [vmem:[%s137 + $0xbc8] sm:$0xff] %v901
        %1286 = vst [vmem:[%s137 + $0xbd0] sm:$0xff] %v902
        %1287 = vst [vmem:[%s137 + $0xbd8] sm:$0xff] %v903
        %1288 = vst [vmem:[%s137 + $0xbe0] sm:$0xff] %v904
        %1289 = vst [vmem:[%s137 + $0xbe8] sm:$0xff] %v905
        %1290 = vst [vmem:[%s137 + $0xbf0] sm:$0xff] %v906
        %1291 = vst [vmem:[%s137 + $0xbf8] sm:$0xff] %v907
        %s1292 = sand.u32 %s52, 1
        %s1293 = scalar_lea.sflag [#allocation4], %s1292
        %s1294 = sand.u32 %s52, 1
        %s1295 = smul.addr %s1294, 3072
        %s1296 = scalar_lea.vmem [#allocation5], %s1295
        // Predicated region
        $region29: #{tpu_custom_call.1} parent=23 // pred_check
          %p1297 = pneg %p62
        $region30: #{tpu_custom_call.1} parent=23 // pred_check_branch
          %1299 = sbr.rel (%p1297) target = $region32
        $region31: #{tpu_custom_call.1} parent=23 // pred_region
          %s1300 = smul.u32 24, %s18
          %1302 = vsyncadd %s1293, 0
          %s1303 = smul.addr %s1300, 16
          %s1304 = smul.addr %s1303, 8
          %s1305 = scalar_lea.hbm %s1, %s1304
          %s1306 = sshll.u32 %s1296, 4
          %s1307 = int_to_ptr.vmem [resolvable:$true] %s1306
          %s1308 = sshll.u32 %s1305, 4
          %s1309 = int_to_ptr.hbm [resolvable:$true] %s1308
          %1314 = dma.vmem_to_hbm [thread:$0]  %s1307, 49152, %s1309, %s1293, 2048, 2048, 128
        $region32: #{tpu_custom_call.1} parent=23 // pred_fallthru
          _
      $region24: #{tpu_custom_call.1} parent=5 // pred_fallthru
        _
      %p1315 = scmp.le.s32.totalorder 2, %s13
      // Predicated region
      $region33: #{tpu_custom_call.1} parent=5 // pred_check
        %p1316 = pneg %p1315
      $region34: #{tpu_custom_call.1} parent=5 // pred_check_branch
        %1318 = sbr.rel (%p1316) target = $region36
      $region35: #{tpu_custom_call.1} parent=5 // pred_region
        %s1319 = ssub.s32 %s13, 2
        // Predicated region
        $region37: #{tpu_custom_call.1} parent=35 // pred_check
          %p1320 = pneg %p68
        $region38: #{tpu_custom_call.1} parent=35 // pred_check_branch
          %1322 = sbr.rel (%p1320) target = $region40
        $region39: #{tpu_custom_call.1} parent=35 // pred_region
          %s1323 = sand.u32 %s53, 1
          %s1324 = scalar_lea.sflag [#allocation4], %s1323
          %s1325 = sand.u32 %s53, 1
          %s1326 = smul.addr %s1325, 3072
          %s1327 = scalar_lea.vmem [#allocation5], %s1326
          %1329 = dma.done %s1324, 49152
        $region40: #{tpu_custom_call.1} parent=35 // pred_fallthru
          _
      $region36: #{tpu_custom_call.1} parent=5 // pred_fallthru
        _
    $region6: #{tpu_custom_call.1} parent=1 // loop_footer
      %s17 = sadd.s32 1, %s13
    $region7: #{tpu_custom_call.1} parent=1 // loop_footer_branch
      %12 = sbr.rel target = $region3
    $region8: #{tpu_custom_call.1} parent=1 // loop_exit
      _
    %1330 = vsyncpa [#allocation3], 1
    %s1331 = scalar_lea.sflag [#allocation3], 1
    %1332 = vsyncpa %s1331, 1
    %1333 = vsyncpa [#allocation4], 1
    %s1334 = scalar_lea.sflag [#allocation4], 1
    %1335 = vsyncpa %s1334, 1

</llo_original>
